<compile_context>
chip_gen: v7x
topology: tpu7x:2x2x1
jax: 0.10.0
libtpu: 0.0.40
codegen_flags: <defaults>
</compile_context>

<pallas_src>
import jax
import jax.numpy as jnp
from jax.experimental import pallas as pl
from jax.experimental.pallas import tpu as pltpu

LN_EPS = 1e-5
CTX_EMB_DIM = 512    # fixed by the PyTorch module (ctx_proj output)
CONF_EMB_DIM = 128   # fixed by the PyTorch module (conf_proj output)


def _layernorm(x, gamma, beta):
    mu = jnp.mean(x, axis=-1, keepdims=True)
    var = jnp.mean((x - mu) ** 2, axis=-1, keepdims=True)
    return (x - mu) * jax.lax.rsqrt(var + LN_EPS) * gamma + beta


def weight_network_kernel(
    ctx_ref, conf_ref,                                   # activations
    g_ctx_ref, be_ctx_ref, g_conf_ref, be_conf_ref,      # LayerNorm params
    wc_ref, bc_ref, wf_ref, bf_ref,                      # ctx_proj / conf_proj
    w1c_ref, w1f_ref, b1_ref, w2_ref, b2_ref,            # mlp layers 1-2
    w3_ref, b3_ref,                                      # mlp output layer (vocab-tiled)
    out_ref,
    h_ref,                                               # VMEM scratch: (tb, h1) compute dtype
):
    # NOTE: the j==0 hidden-cache pattern below is only correct because the
    # vocab axis is the INNER grid axis and marked "arbitrary" (sequential on
    # one core). Do not reorder the grid or mark it "parallel".
    j = pl.program_id(1)

    # Heavy part of the network runs once per batch tile (first vocab tile);
    # the result is cached in VMEM scratch for the remaining vocab tiles.
    @pl.when(j == 0)
    def _compute_hidden():
        cdt = wc_ref.dtype  # matmul compute dtype (bf16 by default, or f32)

        # ctx branch: LN (f32) -> Linear -> ReLU
        ctx = ctx_ref[...].astype(jnp.float32)
        ctx_n = _layernorm(ctx, g_ctx_ref[...], be_ctx_ref[...])
        ctx_emb = jnp.maximum(
            jnp.dot(ctx_n.astype(cdt), wc_ref[...],
                    preferred_element_type=jnp.float32) + bc_ref[...],
            0.0,
        )

        # conf branch: LN (f32) -> Linear -> ReLU
        # TODO(synk): conf_dim is tiny (K=8); this dot wastes an MXU pass but a
        # VPU outer-product path would need cross-lane broadcasts — kept as dot.
        conf = conf_ref[...].astype(jnp.float32)
        conf_n = _layernorm(conf, g_conf_ref[...], be_conf_ref[...])
        conf_emb = jnp.maximum(
            jnp.dot(conf_n.astype(cdt), wf_ref[...],
                    preferred_element_type=jnp.float32) + bf_ref[...],
            0.0,
        )

        # concat + Linear  ==  two dots into one accumulator (no VMEM concat)
        h1 = jnp.dot(ctx_emb.astype(cdt), w1c_ref[...],
                     preferred_element_type=jnp.float32)
        h1 = h1 + jnp.dot(conf_emb.astype(cdt), w1f_ref[...],
                          preferred_element_type=jnp.float32)
        h1 = jnp.maximum(h1 + b1_ref[...], 0.0)

        h2 = jnp.maximum(
            jnp.dot(h1.astype(cdt), w2_ref[...],
                    preferred_element_type=jnp.float32) + b2_ref[...],
            0.0,
        )
        # Scratch lives in the compute dtype: cast once per batch tile instead
        # of once per vocab tile in the hot j-loop.
        h_ref[...] = h2.astype(h_ref.dtype)

    # Output projection for this vocab tile (f32 accumulation).
    logits = jnp.dot(h_ref[...], w3_ref[...],
                     preferred_element_type=jnp.float32) + b3_ref[...]
    # sigmoid(x) == 0.5*(tanh(x/2)+1): a single EUP transcendental per element
    # instead of exp + reciprocal (+ stability select on the VPU).
    out_ref[...] = (0.5 * (jnp.tanh(0.5 * logits) + 1.0)).astype(out_ref.dtype)


def _pick_tile(total, candidates, cap=None):
    for c in candidates:
        if cap is not None and c > cap:
            continue
        if total >= c and total % c == 0:
            return c
    return total


def _vmem_limit_bytes():
    # Hardware query only — no kernel execution inside this try, so a fallback
    # here cannot mask a real kernel failure.
    try:
        cap = pltpu.get_tpu_info().vmem_capacity_bytes
    except Exception:  # pragma: no cover - conservative fallback (assume v7x)
        cap = 64 << 20
    return min(int(0.75 * cap), 100 << 20)


def weight_network_forward(
    ctx_hidden, conf_feat, params, *,
    tb=None, tn=None,
    compute_dtype=jnp.bfloat16,     # bf16 matmuls by default (MXU-native on all gens)
    out_dtype=jnp.bfloat16,         # bf16 output halves the dominant HBM write stream
):
    """Runs the fused WeightNetwork kernel.

    ctx_hidden: (B, ctx_dim) f32
    conf_feat : (B, conf_dim) f32
    params    : dict of weights (see init_params). Linear weights are [in, out].
    """
    B, ctx_dim = ctx_hidden.shape
    _, conf_dim = conf_feat.shape
    h0 = params["w1"].shape[1]
    h1_dim = params["w2"].shape[1]
    vocab = params["w3"].shape[1]

    cbytes = jnp.dtype(compute_dtype).itemsize
    obytes = jnp.dtype(out_dtype).itemsize
    vmem_limit = _vmem_limit_bytes()

    # Tile selection. Big batch tile (each doubling of tb halves W3 re-streaming
    # from HBM), but keep B//tb >= 2 so the "parallel" batch axis can be sharded
    # across both TensorCores on v7x (harmless extra grid step on v5e/v6e).
    if tb is None:
        cap = max(B // 2, 8) if B >= 16 else None
        tb = _pick_tile(B, (2048, 1024, 512, 256, 128, 64, 32, 16, 8), cap=cap)
    if tn is None:
        tn = _pick_tile(vocab, (2048, 1024, 512, 256, 128))

    cd = compute_dtype
    wc = params["wc"].astype(cd)
    wf = params["wf"].astype(cd)
    w1c = params["w1"][:CTX_EMB_DIM].astype(cd)
    w1f = params["w1"][CTX_EMB_DIM:].astype(cd)
    w2 = params["w2"].astype(cd)
    w3 = params["w3"].astype(cd)

    # Weights whose block index is constant across the whole grid.
    const_weights = (
        params["ln_ctx_g"], params["ln_ctx_b"],
        params["ln_conf_g"], params["ln_conf_b"],
        wc, params["bc"], wf, params["bf"],
        w1c, w1f, params["b1"], w2, params["b2"],
    )
    const_bytes = sum(int(a.size) * a.dtype.itemsize for a in const_weights)

    def tile_footprint(tb_, tn_):
        b = 2 * tb_ * (ctx_dim + conf_dim) * 4            # inputs (double-buffered)
        b += 2 * const_bytes                              # constant weight blocks
        b += 2 * (h1_dim * tn_ * cbytes + tn_ * 4)        # w3 / b3 blocks
        b += 2 * tb_ * tn_ * obytes                       # output block
        b += tb_ * h1_dim * cbytes                        # hidden scratch
        return b

    # Shrink tiles if the footprint would exceed ~80% of the VMEM budget.
    while tile_footprint(tb, tn) > int(0.8 * vmem_limit):
        if tn > 128:
            tn //= 2
        elif tb > 8:
            tb //= 2
        else:
            break

    assert B % tb == 0 and (tb % 8 == 0 or tb == B), (B, tb)
    assert vocab % tn == 0 and (tn % 128 == 0 or tn == vocab), (vocab, tn)

    call_args = (ctx_hidden, conf_feat, *const_weights, w3, params["b3"])

    def const_spec(arr):
        return pl.BlockSpec(arr.shape, lambda i, j: (0, 0))

    in_specs = [
        pl.BlockSpec((tb, ctx_dim), lambda i, j: (i, 0)),
        pl.BlockSpec((tb, conf_dim), lambda i, j: (i, 0)),
    ] + [const_spec(a) for a in const_weights] + [
        pl.BlockSpec((h1_dim, tn), lambda i, j: (0, j)),   # w3 (vocab-tiled)
        pl.BlockSpec((1, tn), lambda i, j: (0, j)),        # b3 (vocab-tiled)
    ]

    # Advisory cost estimate so XLA schedules/overlaps around the fused call.
    flops = 2 * B * (
        ctx_dim * CTX_EMB_DIM + conf_dim * CONF_EMB_DIM
        + (CTX_EMB_DIM + CONF_EMB_DIM) * h0 + h0 * h1_dim + h1_dim * vocab
    )
    transcendentals = B * vocab + 2 * B
    bytes_accessed = (
        B * (ctx_dim + conf_dim) * 4
        + const_bytes
        + (B // tb) * (h1_dim * vocab * cbytes + vocab * 4)   # W3 re-streamed per batch tile
        + B * vocab * obytes
    )
    cost = pl.CostEstimate(
        flops=int(flops),
        transcendentals=int(transcendentals),
        bytes_accessed=int(bytes_accessed),
    )

    fn = pl.pallas_call(
        weight_network_kernel,
        out_shape=jax.ShapeDtypeStruct((B, vocab), out_dtype),
        grid_spec=pltpu.PrefetchScalarGridSpec(
            num_scalar_prefetch=0,
            # Batch axis outer/"parallel" (megacore-shardable), vocab axis
            # inner/"arbitrary" (required for the j==0 hidden-cache pattern).
            grid=(B // tb, vocab // tn),
            in_specs=in_specs,
            out_specs=pl.BlockSpec((tb, tn), lambda i, j: (i, j)),
            scratch_shapes=[pltpu.VMEM((tb, h1_dim), compute_dtype)],
        ),
        compiler_params=pltpu.CompilerParams(
            dimension_semantics=("parallel", "arbitrary"),
            vmem_limit_bytes=vmem_limit,
        ),
        cost_estimate=cost,
    )
    return fn(*call_args)


def init_params(key, *, vocab_size, hidden_dims, ctx_dim, conf_dim):
    """Deterministic synthetic init mirroring the PyTorch module's shapes.

    - proj linears: PyTorch default uniform(-1/sqrt(fan_in), 1/sqrt(fan_in))
    - mlp linears : kaiming normal (fan_in, relu gain) weights, bias = 0.1
    - LayerNorms  : gamma = 1, beta = 0
    Linear weights are stored transposed ([in, out]) for the kernel.
    """
    ks = jax.random.split(key, 8)

    def uniform_linear(k, fan_in, fan_out):
        kw, kb = jax.random.split(k)
        bound = 1.0 / jnp.sqrt(fan_in)
        w = jax.random.uniform(kw, (fan_in, fan_out), jnp.float32, -bound, bound)
        b = jax.random.uniform(kb, (1, fan_out), jnp.float32, -bound, bound)
        return w, b

    def kaiming_linear(k, fan_in, fan_out):
        std = jnp.sqrt(2.0 / fan_in)
        w = jax.random.normal(k, (fan_in, fan_out), jnp.float32) * std
        b = jnp.full((1, fan_out), 0.1, jnp.float32)
        return w, b

    wc, bc = uniform_linear(ks[0], ctx_dim, CTX_EMB_DIM)
    wf, bf = uniform_linear(ks[1], conf_dim, CONF_EMB_DIM)
    w1, b1 = kaiming_linear(ks[2], CTX_EMB_DIM + CONF_EMB_DIM, hidden_dims[0])
    w2, b2 = kaiming_linear(ks[3], hidden_dims[0], hidden_dims[1])
    w3, b3 = kaiming_linear(ks[4], hidden_dims[1], vocab_size)

    return dict(
        ln_ctx_g=jnp.ones((1, ctx_dim), jnp.float32),
        ln_ctx_b=jnp.zeros((1, ctx_dim), jnp.float32),
        ln_conf_g=jnp.ones((1, conf_dim), jnp.float32),
        ln_conf_b=jnp.zeros((1, conf_dim), jnp.float32),
        wc=wc, bc=bc, wf=wf, bf=bf,
        w1=w1, b1=b1, w2=w2, b2=b2, w3=w3, b3=b3,
    )


def reference_forward(ctx_hidden, conf_feat, params, compute_dtype=jnp.float32):
    """Pure-JAX reference mirroring the PyTorch forward (and the kernel's dtype
    policy: matmul operands in compute_dtype, f32 accumulation, f32 LN/act)."""
    def dot(a, w):
        return jnp.dot(a.astype(compute_dtype), w.astype(compute_dtype),
                       preferred_element_type=jnp.float32)

    ctx_n = _layernorm(ctx_hidden.astype(jnp.float32),
                       params["ln_ctx_g"], params["ln_ctx_b"])
    ctx_emb = jax.nn.relu(dot(ctx_n, params["wc"]) + params["bc"])
    conf_n = _layernorm(conf_feat.astype(jnp.float32),
                        params["ln_conf_g"], params["ln_conf_b"])
    conf_emb = jax.nn.relu(dot(conf_n, params["wf"]) + params["bf"])
    x = jnp.concatenate([ctx_emb, conf_emb], axis=-1)
    h = jax.nn.relu(dot(x, params["w1"]) + params["b1"])
    h = jax.nn.relu(dot(h, params["w2"]) + params["b2"])
    return jax.nn.sigmoid(dot(h, params["w3"]) + params["b3"])


if __name__ == "__main__":
    # Small shapes consistent with the module (scaled-down dims), chosen so the
    # 2-D grid (batch tiles x vocab tiles) actually has multiple batch steps.
    B = 64
    VOCAB = 512
    HIDDEN = [128, 128]
    CTX_DIM = 256
    CONF_DIM = 8

    key = jax.random.PRNGKey(0)
    k_ctx, k_conf, k_params = jax.random.split(key, 3)

    ctx_hidden = jax.random.normal(k_ctx, (B, CTX_DIM), jnp.float32)
    conf_feat = jax.random.normal(k_conf, (B, CONF_DIM), jnp.float32)
    params = init_params(
        k_params,
        vocab_size=VOCAB,
        hidden_dims=HIDDEN,
        ctx_dim=CTX_DIM,
        conf_dim=CONF_DIM,
    )

    # Default perf path: bf16 matmuls + bf16 output; compare vs bf16 reference.
    out_bf16 = weight_network_forward(ctx_hidden, conf_feat, params)
    out_bf16 = jax.block_until_ready(out_bf16)
    ref_bf16 = reference_forward(ctx_hidden, conf_feat, params,
                                 compute_dtype=jnp.bfloat16)
    assert out_bf16.shape == (B, VOCAB), out_bf16.shape
    err_bf16 = float(jnp.max(jnp.abs(out_bf16.astype(jnp.float32) - ref_bf16)))
    assert err_bf16 < 2e-2, err_bf16

    # f32 path: tight check against the pure-JAX reference.
    out_f32 = weight_network_forward(
        ctx_hidden, conf_feat, params, tb=32, tn=256,
        compute_dtype=jnp.float32, out_dtype=jnp.float32,
    )
    out_f32 = jax.block_until_ready(out_f32)
    ref_f32 = reference_forward(ctx_hidden, conf_feat, params)
    err_f32 = float(jnp.max(jnp.abs(out_f32 - ref_f32)))
    assert err_f32 < 1e-4, err_f32

    print("KERNEL_OK")
</pallas_src>

<mosaic_0001>
module attributes {stable_mosaic.version = 11 : i64} {
  func.func @weight_network_kernel(%arg0: i32, %arg1: i32, %arg2: memref<32x256xf32, #tpu.memory_space<vmem>>, %arg3: memref<32x8xf32, #tpu.memory_space<vmem>>, %arg4: memref<1x256xf32, #tpu.memory_space<vmem>>, %arg5: memref<1x256xf32, #tpu.memory_space<vmem>>, %arg6: memref<1x8xf32, #tpu.memory_space<vmem>>, %arg7: memref<1x8xf32, #tpu.memory_space<vmem>>, %arg8: memref<256x512xbf16, #tpu.memory_space<vmem>>, %arg9: memref<1x512xf32, #tpu.memory_space<vmem>>, %arg10: memref<8x128xbf16, #tpu.memory_space<vmem>>, %arg11: memref<1x128xf32, #tpu.memory_space<vmem>>, %arg12: memref<512x128xbf16, #tpu.memory_space<vmem>>, %arg13: memref<128x128xbf16, #tpu.memory_space<vmem>>, %arg14: memref<1x128xf32, #tpu.memory_space<vmem>>, %arg15: memref<128x128xbf16, #tpu.memory_space<vmem>>, %arg16: memref<1x128xf32, #tpu.memory_space<vmem>>, %arg17: memref<128x512xbf16, #tpu.memory_space<vmem>>, %arg18: memref<1x512xf32, #tpu.memory_space<vmem>>, %arg19: memref<32x512xbf16, #tpu.memory_space<vmem>>, %arg20: memref<32x128xbf16, #tpu.memory_space<vmem>>) attributes {dimension_semantics = [#tpu.dimension_semantics<parallel>, #tpu.dimension_semantics<arbitrary>], iteration_bounds = array<i64: 2, 1>, scalar_prefetch = 0 : i64, scratch_operands = 1 : i64, tpu.core_type = #tpu.core_type<tc>, window_params = [{transform_indices = @transform_0, window_bounds = array<i64: 32, 256>}, {transform_indices = @transform_1, window_bounds = array<i64: 32, 8>}, {pipeline_mode = #tpu.pipeline_mode<synchronous>, transform_indices = @transform_2, window_bounds = array<i64: 1, 256>}, {pipeline_mode = #tpu.pipeline_mode<synchronous>, transform_indices = @transform_3, window_bounds = array<i64: 1, 256>}, {pipeline_mode = #tpu.pipeline_mode<synchronous>, transform_indices = @transform_4, window_bounds = array<i64: 1, 8>}, {pipeline_mode = #tpu.pipeline_mode<synchronous>, transform_indices = @transform_5, window_bounds = array<i64: 1, 8>}, {pipeline_mode = #tpu.pipeline_mode<synchronous>, transform_indices = @transform_6, window_bounds = array<i64: 256, 512>}, {pipeline_mode = #tpu.pipeline_mode<synchronous>, transform_indices = @transform_7, window_bounds = array<i64: 1, 512>}, {pipeline_mode = #tpu.pipeline_mode<synchronous>, transform_indices = @transform_8, window_bounds = array<i64: 8, 128>}, {pipeline_mode = #tpu.pipeline_mode<synchronous>, transform_indices = @transform_9, window_bounds = array<i64: 1, 128>}, {pipeline_mode = #tpu.pipeline_mode<synchronous>, transform_indices = @transform_10, window_bounds = array<i64: 512, 128>}, {pipeline_mode = #tpu.pipeline_mode<synchronous>, transform_indices = @transform_11, window_bounds = array<i64: 128, 128>}, {pipeline_mode = #tpu.pipeline_mode<synchronous>, transform_indices = @transform_12, window_bounds = array<i64: 1, 128>}, {pipeline_mode = #tpu.pipeline_mode<synchronous>, transform_indices = @transform_13, window_bounds = array<i64: 128, 128>}, {pipeline_mode = #tpu.pipeline_mode<synchronous>, transform_indices = @transform_14, window_bounds = array<i64: 1, 128>}, {transform_indices = @transform_15, window_bounds = array<i64: 128, 512>}, {transform_indices = @transform_16, window_bounds = array<i64: 1, 512>}, {transform_indices = @transform_17, window_bounds = array<i64: 32, 512>}]} {
    %c0_i32 = arith.constant 0 : i32
    %0 = arith.cmpi eq, %arg1, %c0_i32 : i32
    %1 = arith.extui %0 : i1 to i32
    %c0_i32_0 = arith.constant 0 : i32
    %2 = arith.cmpi ne, %1, %c0_i32_0 : i32
    scf.if %2 {
      %c0_11 = arith.constant 0 : index
      %c0_12 = arith.constant 0 : index
      %18 = vector.load %arg2[%c0_11, %c0_12] : memref<32x256xf32, #tpu.memory_space<vmem>>, vector<32x256xf32>
      %c0_13 = arith.constant 0 : index
      %c0_14 = arith.constant 0 : index
      %19 = vector.load %arg4[%c0_13, %c0_14] : memref<1x256xf32, #tpu.memory_space<vmem>>, vector<1x256xf32>
      %c0_15 = arith.constant 0 : index
      %c0_16 = arith.constant 0 : index
      %20 = vector.load %arg5[%c0_15, %c0_16] : memref<1x256xf32, #tpu.memory_space<vmem>>, vector<1x256xf32>
      %cst_17 = arith.constant dense<0.000000e+00> : vector<32xf32>
      %21 = vector.multi_reduction <add>, %18, %cst_17 [1] : vector<32x256xf32> to vector<32xf32>
      %22 = vector.shape_cast %21 : vector<32xf32> to vector<32x1xf32>
      %cst_18 = arith.constant 2.560000e+02 : f32
      %23 = vector.broadcast %cst_18 : f32 to vector<32x1xf32>
      %24 = arith.divf %22, %23 : vector<32x1xf32>
      %25 = vector.broadcast %24 : vector<32x1xf32> to vector<32x256xf32>
      %26 = arith.subf %18, %25 : vector<32x256xf32>
      %27 = arith.mulf %26, %26 : vector<32x256xf32>
      %cst_19 = arith.constant dense<0.000000e+00> : vector<32xf32>
      %28 = vector.multi_reduction <add>, %27, %cst_19 [1] : vector<32x256xf32> to vector<32xf32>
      %29 = vector.shape_cast %28 : vector<32xf32> to vector<32x1xf32>
      %cst_20 = arith.constant 2.560000e+02 : f32
      %30 = vector.broadcast %cst_20 : f32 to vector<32x1xf32>
      %31 = arith.divf %29, %30 : vector<32x1xf32>
      %32 = vector.broadcast %24 : vector<32x1xf32> to vector<32x256xf32>
      %33 = arith.subf %18, %32 : vector<32x256xf32>
      %cst_21 = arith.constant 9.99999974E-6 : f32
      %34 = vector.broadcast %cst_21 : f32 to vector<32x1xf32>
      %35 = arith.addf %31, %34 : vector<32x1xf32>
      %36 = math.rsqrt %35 : vector<32x1xf32>
      %37 = vector.broadcast %36 : vector<32x1xf32> to vector<32x256xf32>
      %38 = arith.mulf %33, %37 : vector<32x256xf32>
      %39 = vector.broadcast %19 : vector<1x256xf32> to vector<32x256xf32>
      %40 = arith.mulf %38, %39 : vector<32x256xf32>
      %41 = vector.broadcast %20 : vector<1x256xf32> to vector<32x256xf32>
      %42 = arith.addf %40, %41 : vector<32x256xf32>
      %43 = arith.truncf %42 : vector<32x256xf32> to vector<32x256xbf16>
      %c0_22 = arith.constant 0 : index
      %c0_23 = arith.constant 0 : index
      %44 = vector.load %arg8[%c0_22, %c0_23] : memref<256x512xbf16, #tpu.memory_space<vmem>>, vector<256x512xbf16>
      %cst_24 = arith.constant dense<0.000000e+00> : vector<32x512xf32>
      %45 = tpu.matmul %43, %44, %cst_24 {dimension_numbers = #tpu.dot_dimension_numbers<[1], [0], [0], [1], [0, 0, 1, 1], [], []>} : vector<32x256xbf16>, vector<256x512xbf16>, vector<32x512xf32> -> vector<32x512xf32>
      %c0_25 = arith.constant 0 : index
      %c0_26 = arith.constant 0 : index
      %46 = vector.load %arg9[%c0_25, %c0_26] : memref<1x512xf32, #tpu.memory_space<vmem>>, vector<1x512xf32>
      %47 = vector.broadcast %46 : vector<1x512xf32> to vector<32x512xf32>
      %48 = arith.addf %45, %47 : vector<32x512xf32>
      %cst_27 = arith.constant 0.000000e+00 : f32
      %49 = vector.broadcast %cst_27 : f32 to vector<32x512xf32>
      %50 = arith.maximumf %48, %49 : vector<32x512xf32>
      %c0_28 = arith.constant 0 : index
      %c0_29 = arith.constant 0 : index
      %51 = vector.load %arg3[%c0_28, %c0_29] : memref<32x8xf32, #tpu.memory_space<vmem>>, vector<32x8xf32>
      %c0_30 = arith.constant 0 : index
      %c0_31 = arith.constant 0 : index
      %52 = vector.load %arg6[%c0_30, %c0_31] : memref<1x8xf32, #tpu.memory_space<vmem>>, vector<1x8xf32>
      %c0_32 = arith.constant 0 : index
      %c0_33 = arith.constant 0 : index
      %53 = vector.load %arg7[%c0_32, %c0_33] : memref<1x8xf32, #tpu.memory_space<vmem>>, vector<1x8xf32>
      %cst_34 = arith.constant dense<0.000000e+00> : vector<32xf32>
      %54 = vector.multi_reduction <add>, %51, %cst_34 [1] : vector<32x8xf32> to vector<32xf32>
      %55 = vector.shape_cast %54 : vector<32xf32> to vector<32x1xf32>
      %cst_35 = arith.constant 8.000000e+00 : f32
      %56 = vector.broadcast %cst_35 : f32 to vector<32x1xf32>
      %57 = arith.divf %55, %56 : vector<32x1xf32>
      %58 = vector.broadcast %57 : vector<32x1xf32> to vector<32x8xf32>
      %59 = arith.subf %51, %58 : vector<32x8xf32>
      %60 = arith.mulf %59, %59 : vector<32x8xf32>
      %cst_36 = arith.constant dense<0.000000e+00> : vector<32xf32>
      %61 = vector.multi_reduction <add>, %60, %cst_36 [1] : vector<32x8xf32> to vector<32xf32>
      %62 = vector.shape_cast %61 : vector<32xf32> to vector<32x1xf32>
      %cst_37 = arith.constant 8.000000e+00 : f32
      %63 = vector.broadcast %cst_37 : f32 to vector<32x1xf32>
      %64 = arith.divf %62, %63 : vector<32x1xf32>
      %65 = vector.broadcast %57 : vector<32x1xf32> to vector<32x8xf32>
      %66 = arith.subf %51, %65 : vector<32x8xf32>
      %cst_38 = arith.constant 9.99999974E-6 : f32
      %67 = vector.broadcast %cst_38 : f32 to vector<32x1xf32>
      %68 = arith.addf %64, %67 : vector<32x1xf32>
      %69 = math.rsqrt %68 : vector<32x1xf32>
      %70 = vector.broadcast %69 : vector<32x1xf32> to vector<32x8xf32>
      %71 = arith.mulf %66, %70 : vector<32x8xf32>
      %72 = vector.broadcast %52 : vector<1x8xf32> to vector<32x8xf32>
      %73 = arith.mulf %71, %72 : vector<32x8xf32>
      %74 = vector.broadcast %53 : vector<1x8xf32> to vector<32x8xf32>
      %75 = arith.addf %73, %74 : vector<32x8xf32>
      %76 = arith.truncf %75 : vector<32x8xf32> to vector<32x8xbf16>
      %c0_39 = arith.constant 0 : index
      %c0_40 = arith.constant 0 : index
      %77 = vector.load %arg10[%c0_39, %c0_40] : memref<8x128xbf16, #tpu.memory_space<vmem>>, vector<8x128xbf16>
      %cst_41 = arith.constant dense<0.000000e+00> : vector<32x128xf32>
      %78 = tpu.matmul %76, %77, %cst_41 {dimension_numbers = #tpu.dot_dimension_numbers<[1], [0], [0], [1], [0, 0, 1, 1], [], []>} : vector<32x8xbf16>, vector<8x128xbf16>, vector<32x128xf32> -> vector<32x128xf32>
      %c0_42 = arith.constant 0 : index
      %c0_43 = arith.constant 0 : index
      %79 = vector.load %arg11[%c0_42, %c0_43] : memref<1x128xf32, #tpu.memory_space<vmem>>, vector<1x128xf32>
      %80 = vector.broadcast %79 : vector<1x128xf32> to vector<32x128xf32>
      %81 = arith.addf %78, %80 : vector<32x128xf32>
      %cst_44 = arith.constant 0.000000e+00 : f32
      %82 = vector.broadcast %cst_44 : f32 to vector<32x128xf32>
      %83 = arith.maximumf %81, %82 : vector<32x128xf32>
      %84 = arith.truncf %50 : vector<32x512xf32> to vector<32x512xbf16>
      %c0_45 = arith.constant 0 : index
      %c0_46 = arith.constant 0 : index
      %85 = vector.load %arg12[%c0_45, %c0_46] : memref<512x128xbf16, #tpu.memory_space<vmem>>, vector<512x128xbf16>
      %cst_47 = arith.constant dense<0.000000e+00> : vector<32x128xf32>
      %86 = tpu.matmul %84, %85, %cst_47 {dimension_numbers = #tpu.dot_dimension_numbers<[1], [0], [0], [1], [0, 0, 1, 1], [], []>} : vector<32x512xbf16>, vector<512x128xbf16>, vector<32x128xf32> -> vector<32x128xf32>
      %87 = arith.truncf %83 : vector<32x128xf32> to vector<32x128xbf16>
      %c0_48 = arith.constant 0 : index
      %c0_49 = arith.constant 0 : index
      %88 = vector.load %arg13[%c0_48, %c0_49] : memref<128x128xbf16, #tpu.memory_space<vmem>>, vector<128x128xbf16>
      %cst_50 = arith.constant dense<0.000000e+00> : vector<32x128xf32>
      %89 = tpu.matmul %87, %88, %cst_50 {dimension_numbers = #tpu.dot_dimension_numbers<[1], [0], [0], [1], [0, 0, 1, 1], [], []>} : vector<32x128xbf16>, vector<128x128xbf16>, vector<32x128xf32> -> vector<32x128xf32>
      %90 = arith.addf %86, %89 : vector<32x128xf32>
      %c0_51 = arith.constant 0 : index
      %c0_52 = arith.constant 0 : index
      %91 = vector.load %arg14[%c0_51, %c0_52] : memref<1x128xf32, #tpu.memory_space<vmem>>, vector<1x128xf32>
      %92 = vector.broadcast %91 : vector<1x128xf32> to vector<32x128xf32>
      %93 = arith.addf %90, %92 : vector<32x128xf32>
      %cst_53 = arith.constant 0.000000e+00 : f32
      %94 = vector.broadcast %cst_53 : f32 to vector<32x128xf32>
      %95 = arith.maximumf %93, %94 : vector<32x128xf32>
      %96 = arith.truncf %95 : vector<32x128xf32> to vector<32x128xbf16>
      %c0_54 = arith.constant 0 : index
      %c0_55 = arith.constant 0 : index
      %97 = vector.load %arg15[%c0_54, %c0_55] : memref<128x128xbf16, #tpu.memory_space<vmem>>, vector<128x128xbf16>
      %cst_56 = arith.constant dense<0.000000e+00> : vector<32x128xf32>
      %98 = tpu.matmul %96, %97, %cst_56 {dimension_numbers = #tpu.dot_dimension_numbers<[1], [0], [0], [1], [0, 0, 1, 1], [], []>} : vector<32x128xbf16>, vector<128x128xbf16>, vector<32x128xf32> -> vector<32x128xf32>
      %c0_57 = arith.constant 0 : index
      %c0_58 = arith.constant 0 : index
      %99 = vector.load %arg16[%c0_57, %c0_58] : memref<1x128xf32, #tpu.memory_space<vmem>>, vector<1x128xf32>
      %100 = vector.broadcast %99 : vector<1x128xf32> to vector<32x128xf32>
      %101 = arith.addf %98, %100 : vector<32x128xf32>
      %cst_59 = arith.constant 0.000000e+00 : f32
      %102 = vector.broadcast %cst_59 : f32 to vector<32x128xf32>
      %103 = arith.maximumf %101, %102 : vector<32x128xf32>
      %104 = arith.truncf %103 : vector<32x128xf32> to vector<32x128xbf16>
      %c0_60 = arith.constant 0 : index
      %c0_61 = arith.constant 0 : index
      %105 = vector.load %arg20[%c0_60, %c0_61] : memref<32x128xbf16, #tpu.memory_space<vmem>>, vector<32x128xbf16>
      tpu.vector_store %arg20[%c0_60, %c0_61], %104 {strides = array<i32>} : memref<32x128xbf16, #tpu.memory_space<vmem>>, vector<32x128xbf16>,
    } else {
    }
    %c0 = arith.constant 0 : index
    %c0_1 = arith.constant 0 : index
    %3 = vector.load %arg20[%c0, %c0_1] : memref<32x128xbf16, #tpu.memory_space<vmem>>, vector<32x128xbf16>
    %c0_2 = arith.constant 0 : index
    %c0_3 = arith.constant 0 : index
    %4 = vector.load %arg17[%c0_2, %c0_3] : memref<128x512xbf16, #tpu.memory_space<vmem>>, vector<128x512xbf16>
    %cst = arith.constant dense<0.000000e+00> : vector<32x512xf32>
    %5 = tpu.matmul %3, %4, %cst {dimension_numbers = #tpu.dot_dimension_numbers<[1], [0], [0], [1], [0, 0, 1, 1], [], []>} : vector<32x128xbf16>, vector<128x512xbf16>, vector<32x512xf32> -> vector<32x512xf32>
    %c0_4 = arith.constant 0 : index
    %c0_5 = arith.constant 0 : index
    %6 = vector.load %arg18[%c0_4, %c0_5] : memref<1x512xf32, #tpu.memory_space<vmem>>, vector<1x512xf32>
    %7 = vector.broadcast %6 : vector<1x512xf32> to vector<32x512xf32>
    %8 = arith.addf %5, %7 : vector<32x512xf32>
    %cst_6 = arith.constant 5.000000e-01 : f32
    %9 = vector.broadcast %cst_6 : f32 to vector<32x512xf32>
    %10 = arith.mulf %9, %8 : vector<32x512xf32>
    %11 = math.tanh %10 : vector<32x512xf32>
    %cst_7 = arith.constant 1.000000e+00 : f32
    %12 = vector.broadcast %cst_7 : f32 to vector<32x512xf32>
    %13 = arith.addf %11, %12 : vector<32x512xf32>
    %cst_8 = arith.constant 5.000000e-01 : f32
    %14 = vector.broadcast %cst_8 : f32 to vector<32x512xf32>
    %15 = arith.mulf %14, %13 : vector<32x512xf32>
    %16 = arith.truncf %15 : vector<32x512xf32> to vector<32x512xbf16>
    %c0_9 = arith.constant 0 : index
    %c0_10 = arith.constant 0 : index
    %17 = vector.load %arg19[%c0_9, %c0_10] : memref<32x512xbf16, #tpu.memory_space<vmem>>, vector<32x512xbf16>
    tpu.vector_store %arg19[%c0_9, %c0_10], %16 {strides = array<i32>} : memref<32x512xbf16, #tpu.memory_space<vmem>>, vector<32x512xbf16>,
    return
  }
  func.func @transform_0(%arg0: i32, %arg1: i32) -> (i32, i32) {
    %c0_i32 = arith.constant 0 : i32
    %c0_i32_0 = arith.constant 0 : i32
    return %arg0, %c0_i32 : i32, i32
  }
  func.func @transform_1(%arg0: i32, %arg1: i32) -> (i32, i32) {
    %c0_i32 = arith.constant 0 : i32
    %c0_i32_0 = arith.constant 0 : i32
    return %arg0, %c0_i32 : i32, i32
  }
  func.func @transform_2(%arg0: i32, %arg1: i32) -> (i32, i32) {
    %c0_i32 = arith.constant 0 : i32
    %c0_i32_0 = arith.constant 0 : i32
    %c0_i32_1 = arith.constant 0 : i32
    return %c0_i32, %c0_i32_0 : i32, i32
  }
  func.func @transform_3(%arg0: i32, %arg1: i32) -> (i32, i32) {
    %c0_i32 = arith.constant 0 : i32
    %c0_i32_0 = arith.constant 0 : i32
    %c0_i32_1 = arith.constant 0 : i32
    return %c0_i32, %c0_i32_0 : i32, i32
  }
  func.func @transform_4(%arg0: i32, %arg1: i32) -> (i32, i32) {
    %c0_i32 = arith.constant 0 : i32
    %c0_i32_0 = arith.constant 0 : i32
    %c0_i32_1 = arith.constant 0 : i32
    return %c0_i32, %c0_i32_0 : i32, i32
  }
  func.func @transform_5(%arg0: i32, %arg1: i32) -> (i32, i32) {
    %c0_i32 = arith.constant 0 : i32
    %c0_i32_0 = arith.constant 0 : i32
    %c0_i32_1 = arith.constant 0 : i32
    return %c0_i32, %c0_i32_0 : i32, i32
  }
  func.func @transform_6(%arg0: i32, %arg1: i32) -> (i32, i32) {
    %c0_i32 = arith.constant 0 : i32
    %c0_i32_0 = arith.constant 0 : i32
    %c0_i32_1 = arith.constant 0 : i32
    return %c0_i32, %c0_i32_0 : i32, i32
  }
  func.func @transform_7(%arg0: i32, %arg1: i32) -> (i32, i32) {
    %c0_i32 = arith.constant 0 : i32
    %c0_i32_0 = arith.constant 0 : i32
    %c0_i32_1 = arith.constant 0 : i32
    return %c0_i32, %c0_i32_0 : i32, i32
  }
  func.func @transform_8(%arg0: i32, %arg1: i32) -> (i32, i32) {
    %c0_i32 = arith.constant 0 : i32
    %c0_i32_0 = arith.constant 0 : i32
    %c0_i32_1 = arith.constant 0 : i32
    return %c0_i32, %c0_i32_0 : i32, i32
  }
  func.func @transform_9(%arg0: i32, %arg1: i32) -> (i32, i32) {
    %c0_i32 = arith.constant 0 : i32
    %c0_i32_0 = arith.constant 0 : i32
    %c0_i32_1 = arith.constant 0 : i32
    return %c0_i32, %c0_i32_0 : i32, i32
  }
  func.func @transform_10(%arg0: i32, %arg1: i32) -> (i32, i32) {
    %c0_i32 = arith.constant 0 : i32
    %c0_i32_0 = arith.constant 0 : i32
    %c0_i32_1 = arith.constant 0 : i32
    return %c0_i32, %c0_i32_0 : i32, i32
  }
  func.func @transform_11(%arg0: i32, %arg1: i32) -> (i32, i32) {
    %c0_i32 = arith.constant 0 : i32
    %c0_i32_0 = arith.constant 0 : i32
    %c0_i32_1 = arith.constant 0 : i32
    return %c0_i32, %c0_i32_0 : i32, i32
  }
  func.func @transform_12(%arg0: i32, %arg1: i32) -> (i32, i32) {
    %c0_i32 = arith.constant 0 : i32
    %c0_i32_0 = arith.constant 0 : i32
    %c0_i32_1 = arith.constant 0 : i32
    return %c0_i32, %c0_i32_0 : i32, i32
  }
  func.func @transform_13(%arg0: i32, %arg1: i32) -> (i32, i32) {
    %c0_i32 = arith.constant 0 : i32
    %c0_i32_0 = arith.constant 0 : i32
    %c0_i32_1 = arith.constant 0 : i32
    return %c0_i32, %c0_i32_0 : i32, i32
  }
  func.func @transform_14(%arg0: i32, %arg1: i32) -> (i32, i32) {
    %c0_i32 = arith.constant 0 : i32
    %c0_i32_0 = arith.constant 0 : i32
    %c0_i32_1 = arith.constant 0 : i32
    return %c0_i32, %c0_i32_0 : i32, i32
  }
  func.func @transform_15(%arg0: i32, %arg1: i32) -> (i32, i32) {
    %c0_i32 = arith.constant 0 : i32
    %c0_i32_0 = arith.constant 0 : i32
    return %c0_i32, %arg1 : i32, i32
  }
  func.func @transform_16(%arg0: i32, %arg1: i32) -> (i32, i32) {
    %c0_i32 = arith.constant 0 : i32
    %c0_i32_0 = arith.constant 0 : i32
    return %c0_i32, %arg1 : i32, i32
  }
  func.func @transform_17(%arg0: i32, %arg1: i32) -> (i32, i32) {
    %c0_i32 = arith.constant 0 : i32
    return %arg0, %arg1 : i32, i32
  }
}

</mosaic_0001>

<llo_original>
// kernel: tpu_custom_call.1
$region0: #{tpu_custom_call.1}
  #allocation0 [shape = 'u32[]', space=smem, size = 0x4, offset = 0x4, fixed_abs, tag = 'smem constant byte address 0x4 - core index']
  #allocation1 [shape = 'u32[144,128]{1,0:T(1,128)}', space=vmem, size = 0x12000, scoped, tag = 'internal scratch']
  #allocation2 [shape = 'bf16[32,128]{1,0:T(16,128)(2,1)}', space=vmem, size = 0x2000, scoped, tag = 'scratch operand']
  %s0 = inlined_call_operand.hbm [shape: f32[64,256], index: 0, kind: input, shape index: {}]
  %s1 = inlined_call_operand.vmem [shape: f32[64,8], index: 1, kind: input, shape index: {}]
  %s2 = inlined_call_operand.vmem [shape: f32[1,256], index: 2, kind: input, shape index: {}]
  %s3 = inlined_call_operand.vmem [shape: f32[1,256], index: 3, kind: input, shape index: {}]
  %s4 = inlined_call_operand.vmem [shape: f32[1,8], index: 4, kind: input, shape index: {}]
  %s5 = inlined_call_operand.vmem [shape: f32[1,8], index: 5, kind: input, shape index: {}]
  %s6 = inlined_call_operand.hbm [shape: bf16[256,512], index: 6, kind: input, shape index: {}]
  %s7 = inlined_call_operand.vmem [shape: f32[1,512], index: 7, kind: input, shape index: {}]
  %s8 = inlined_call_operand.vmem [shape: bf16[8,128], index: 8, kind: input, shape index: {}]
  %s9 = inlined_call_operand.vmem [shape: f32[1,128], index: 9, kind: input, shape index: {}]
  %s10 = inlined_call_operand.hbm [shape: bf16[512,128], index: 10, kind: input, shape index: {}]
  %s11 = inlined_call_operand.vmem [shape: bf16[128,128], index: 11, kind: input, shape index: {}]
  %s12 = inlined_call_operand.vmem [shape: f32[1,128], index: 12, kind: input, shape index: {}]
  %s13 = inlined_call_operand.hbm [shape: bf16[128,128], index: 13, kind: input, shape index: {}]
  %s14 = inlined_call_operand.vmem [shape: f32[1,128], index: 14, kind: input, shape index: {}]
  %s15 = inlined_call_operand.hbm [shape: bf16[128,512], index: 15, kind: input, shape index: {}]
  %s16 = inlined_call_operand.vmem [shape: f32[1,512], index: 16, kind: input, shape index: {}]
  %s17 = inlined_call_operand.hbm [shape: bf16[64,512], index: 17, kind: output, shape index: {}]
  %s18 = sld [smem:[#allocation0]]
  $region125: #{tpu_custom_call.1} parent=0
    _
  %s20 = ssub.s32 1, %s18
  %s21 = scalar_select 0, %s20, %s18
  $region1: #{tpu_custom_call.1} parent=0
    #allocation3 [shape = 'u8[65536]{0}', space=vmem, size = 0x10000, scoped, tag = 'input window, operand 0']
    #allocation4 [shape = 's32[2]{0}', space=sflag, size = 0x8, scoped, tag = 'scoped memory for tpu_custom_call.1']
    #allocation5 [shape = 's32[2]{0}', space=sflag, size = 0x8, scoped, tag = 'scoped memory for tpu_custom_call.1']
    #allocation6 [shape = 'u8[262144]{0}', space=vmem, size = 0x40000, scoped, tag = 'input window, operand 6, single buffered']
    #allocation7 [shape = 's32[1]{0}', space=sflag, size = 0x4, scoped, tag = 'scoped memory for tpu_custom_call.1']
    #allocation8 [shape = 'u8[131072]{0}', space=vmem, size = 0x20000, scoped, tag = 'input window, operand 10, single buffered']
    #allocation9 [shape = 'u8[32768]{0}', space=vmem, size = 0x8000, scoped, tag = 'input window, operand 13, single buffered']
    #allocation10 [shape = 's32[1]{0}', space=sflag, size = 0x4, scoped, tag = 'scoped memory for tpu_custom_call.1']
    #allocation11 [shape = 'u8[131072]{0}', space=vmem, size = 0x20000, scoped, tag = 'input window, operand 15, single buffered']
    #allocation12 [shape = 'u8[65536]{0}', space=vmem, size = 0x10000, scoped, tag = 'output window, operand 0']
    %22 = vsyncpa [#allocation4], 0
    %s23 = scalar_lea.sflag [#allocation4], 1
    %24 = vsyncpa %s23, 0
    %25 = vsyncpa [#allocation7], 0
    %26 = vsyncpa [#allocation10], 0
    %27 = vsyncpa [#allocation5], 0
    %s28 = scalar_lea.sflag [#allocation5], 1
    %29 = vsyncpa %s28, 0
    loop: start=0, step=1, limit=4
    $region2: #{tpu_custom_call.1} parent=1 // loop_pre_header
      _
    $region3: #{tpu_custom_call.1} parent=1 // loop_header
      %s31 = sphi 0, %s35
      %p32 = scmp.ge.s32.totalorder %s31, 4
      %s38 = sphi 0, %s50
      %s39 = sphi 0, %s46
      %s40 = sphi 0, %s38
      %s41 = sphi 0, %s39
      %s42 = sphi 0, %s40
      %s43 = sphi 0, %s41
      %s53 = sphi 0, %s55
      %s56 = sphi 0, %s53
      %s57 = sphi 0, %s56
      %s73 = sphi 0, %s57
      %s79 = sphi 0, %s81
      %s82 = sphi 0, %s79
      %s83 = sphi 0, %s82
      %s99 = sphi 0, %s83
      %s103 = sphi 0, %s103
      %s105 = sphi 0, %s103
      %s106 = sphi 0, %s105
      %s120 = sphi 0, %s106
      %s124 = sphi 0, %s124
      %s126 = sphi 0, %s124
      %s127 = sphi 0, %s126
      %s141 = sphi 0, %s127
      %s145 = sphi 0, %s145
      %s147 = sphi 0, %s145
      %s148 = sphi 0, %s147
      %s162 = sphi 0, %s148
      %s166 = sphi 0, %s166
      %s168 = sphi 0, %s166
      %s169 = sphi 0, %s168
      %s183 = sphi 0, %s169
      %s187 = sphi 0, %s187
      %s189 = sphi 0, %s187
      %s190 = sphi 0, %s189
      %s204 = sphi 0, %s190
      %s208 = sphi 0, %s208
      %s210 = sphi 0, %s208
      %s211 = sphi 0, %s210
      %s225 = sphi 0, %s211
      %s229 = sphi 0, %s229
      %s231 = sphi 0, %s229
      %s232 = sphi 0, %s231
      %s246 = sphi 0, %s232
      %s250 = sphi 0, %s250
      %s252 = sphi 0, %s250
      %s253 = sphi 0, %s252
      %s267 = sphi 0, %s253
      %s271 = sphi 0, %s271
      %s273 = sphi 0, %s271
      %s274 = sphi 0, %s273
      %s288 = sphi 0, %s274
      %s292 = sphi 0, %s292
      %s294 = sphi 0, %s292
      %s295 = sphi 0, %s294
      %s309 = sphi 0, %s295
      %s313 = sphi 0, %s313
      %s315 = sphi 0, %s313
      %s316 = sphi 0, %s315
      %s330 = sphi 0, %s316
      %s334 = sphi 0, %s334
      %s336 = sphi 0, %s334
      %s337 = sphi 0, %s336
      %s351 = sphi 0, %s337
      %s355 = sphi 0, %s355
      %s357 = sphi 0, %s355
      %s358 = sphi 0, %s357
      %s372 = sphi 0, %s358
      %s378 = sphi 0, %s380
      %s381 = sphi 0, %s378
      %s382 = sphi 0, %s381
      %s398 = sphi 0, %s382
      %s404 = sphi 0, %s406
      %s407 = sphi 0, %s404
      %s408 = sphi 0, %s407
      %s424 = sphi 0, %s408
      %s432 = sphi 0, %s434
      %s435 = sphi 0, %s432
      %s436 = sphi 0, %s435
      %s452 = sphi 0, %s436
    $region4: #{tpu_custom_call.1} parent=1 // loop_header_branch
      %34 = sbr.rel (%p32) target = $region8
    $region5: #{tpu_custom_call.1} parent=1 // loop_body
      %s36 = ssub.s32 %s31, 1
      %s37 = ssub.s32 %s31, 2
      %s44 = sadd.s32 1, %s39
      %p45 = scmp.ge.s32.totalorder %s44, 1
      %s46 = scalar_select %p45, 0, %s44
      %s47 = sadd.s32 1, %s38
      %s48 = scalar_select %p45, %s47, %s38
      %p49 = scmp.ge.s32.totalorder %s48, 2
      %s50 = scalar_select %p49, 0, %s48
      %s51 = ssub.s32 %s38, %s50
      %p52 = scmp.eq.s32.totalorder %s51, 0
      %s54 = sadd.s32 %s53, 1
      %s55 = scalar_select %p52, %s53, %s54
      %p58 = pneg %p52
      %p59 = scmp.eq.s32.totalorder %s31, 1
      %p60 = por %p58, %p59
      %p61 = scmp.ne.s32.totalorder %s53, %s56
      %p62 = scmp.eq.s32.totalorder %s31, 0
      %p63 = por %p61, %p62
      %p64 = scmp.ne.s32.totalorder %s53, %s56
      %p65 = scmp.eq.s32.totalorder %s36, 1
      %p66 = por %p64, %p65
      %p67 = scmp.ne.s32.totalorder %s56, %s57
      %p68 = scmp.eq.s32.totalorder %s36, 0
      %p69 = por %p67, %p68
      %p70 = scmp.ne.s32.totalorder %s56, %s57
      %p71 = scmp.eq.s32.totalorder %s37, 1
      %p72 = por %p70, %p71
      %p74 = scmp.ne.s32.totalorder %s57, %s73
      %p75 = scmp.eq.s32.totalorder %s37, 0
      %p76 = por %p74, %p75
      %s77 = ssub.s32 %s38, %s50
      %p78 = scmp.eq.s32.totalorder %s77, 0
      %s80 = sadd.s32 %s79, 1
      %s81 = scalar_select %p78, %s79, %s80
      %p84 = pneg %p78
      %p85 = scmp.eq.s32.totalorder %s31, 1
      %p86 = por %p84, %p85
      %p87 = scmp.ne.s32.totalorder %s79, %s82
      %p88 = scmp.eq.s32.totalorder %s31, 0
      %p89 = por %p87, %p88
      %p90 = scmp.ne.s32.totalorder %s79, %s82
      %p91 = scmp.eq.s32.totalorder %s36, 1
      %p92 = por %p90, %p91
      %p93 = scmp.ne.s32.totalorder %s82, %s83
      %p94 = scmp.eq.s32.totalorder %s36, 0
      %p95 = por %p93, %p94
      %p96 = scmp.ne.s32.totalorder %s82, %s83
      %p97 = scmp.eq.s32.totalorder %s37, 1
      %p98 = por %p96, %p97
      %p100 = scmp.ne.s32.totalorder %s83, %s99
      %p101 = scmp.eq.s32.totalorder %s37, 0
      %p102 = por %p100, %p101
      %s104 = sadd.s32 %s103, 1
      %p107 = scmp.eq.s32.totalorder %s31, 1
      %p108 = scmp.ne.s32.totalorder %s103, %s105
      %p109 = scmp.eq.s32.totalorder %s31, 0
      %p110 = por %p108, %p109
      %p111 = scmp.ne.s32.totalorder %s103, %s105
      %p112 = scmp.eq.s32.totalorder %s36, 1
      %p113 = por %p111, %p112
      %p114 = scmp.ne.s32.totalorder %s105, %s106
      %p115 = scmp.eq.s32.totalorder %s36, 0
      %p116 = por %p114, %p115
      %p117 = scmp.ne.s32.totalorder %s105, %s106
      %p118 = scmp.eq.s32.totalorder %s37, 1
      %p119 = por %p117, %p118
      %p121 = scmp.ne.s32.totalorder %s106, %s120
      %p122 = scmp.eq.s32.totalorder %s37, 0
      %p123 = por %p121, %p122
      %s125 = sadd.s32 %s124, 1
      %p128 = scmp.eq.s32.totalorder %s31, 1
      %p129 = scmp.ne.s32.totalorder %s124, %s126
      %p130 = scmp.eq.s32.totalorder %s31, 0
      %p131 = por %p129, %p130
      %p132 = scmp.ne.s32.totalorder %s124, %s126
      %p133 = scmp.eq.s32.totalorder %s36, 1
      %p134 = por %p132, %p133
      %p135 = scmp.ne.s32.totalorder %s126, %s127
      %p136 = scmp.eq.s32.totalorder %s36, 0
      %p137 = por %p135, %p136
      %p138 = scmp.ne.s32.totalorder %s126, %s127
      %p139 = scmp.eq.s32.totalorder %s37, 1
      %p140 = por %p138, %p139
      %p142 = scmp.ne.s32.totalorder %s127, %s141
      %p143 = scmp.eq.s32.totalorder %s37, 0
      %p144 = por %p142, %p143
      %s146 = sadd.s32 %s145, 1
      %p149 = scmp.eq.s32.totalorder %s31, 1
      %p150 = scmp.ne.s32.totalorder %s145, %s147
      %p151 = scmp.eq.s32.totalorder %s31, 0
      %p152 = por %p150, %p151
      %p153 = scmp.ne.s32.totalorder %s145, %s147
      %p154 = scmp.eq.s32.totalorder %s36, 1
      %p155 = por %p153, %p154
      %p156 = scmp.ne.s32.totalorder %s147, %s148
      %p157 = scmp.eq.s32.totalorder %s36, 0
      %p158 = por %p156, %p157
      %p159 = scmp.ne.s32.totalorder %s147, %s148
      %p160 = scmp.eq.s32.totalorder %s37, 1
      %p161 = por %p159, %p160
      %p163 = scmp.ne.s32.totalorder %s148, %s162
      %p164 = scmp.eq.s32.totalorder %s37, 0
      %p165 = por %p163, %p164
      %s167 = sadd.s32 %s166, 1
      %p170 = scmp.eq.s32.totalorder %s31, 1
      %p171 = scmp.ne.s32.totalorder %s166, %s168
      %p172 = scmp.eq.s32.totalorder %s31, 0
      %p173 = por %p171, %p172
      %p174 = scmp.ne.s32.totalorder %s166, %s168
      %p175 = scmp.eq.s32.totalorder %s36, 1
      %p176 = por %p174, %p175
      %p177 = scmp.ne.s32.totalorder %s168, %s169
      %p178 = scmp.eq.s32.totalorder %s36, 0
      %p179 = por %p177, %p178
      %p180 = scmp.ne.s32.totalorder %s168, %s169
      %p181 = scmp.eq.s32.totalorder %s37, 1
      %p182 = por %p180, %p181
      %p184 = scmp.ne.s32.totalorder %s169, %s183
      %p185 = scmp.eq.s32.totalorder %s37, 0
      %p186 = por %p184, %p185
      %s188 = sadd.s32 %s187, 1
      %p191 = scmp.eq.s32.totalorder %s31, 1
      %p192 = scmp.ne.s32.totalorder %s187, %s189
      %p193 = scmp.eq.s32.totalorder %s31, 0
      %p194 = por %p192, %p193
      %p195 = scmp.ne.s32.totalorder %s187, %s189
      %p196 = scmp.eq.s32.totalorder %s36, 1
      %p197 = por %p195, %p196
      %p198 = scmp.ne.s32.totalorder %s189, %s190
      %p199 = scmp.eq.s32.totalorder %s36, 0
      %p200 = por %p198, %p199
      %p201 = scmp.ne.s32.totalorder %s189, %s190
      %p202 = scmp.eq.s32.totalorder %s37, 1
      %p203 = por %p201, %p202
      %p205 = scmp.ne.s32.totalorder %s190, %s204
      %p206 = scmp.eq.s32.totalorder %s37, 0
      %p207 = por %p205, %p206
      %s209 = sadd.s32 %s208, 1
      %p212 = scmp.eq.s32.totalorder %s31, 1
      %p213 = scmp.ne.s32.totalorder %s208, %s210
      %p214 = scmp.eq.s32.totalorder %s31, 0
      %p215 = por %p213, %p214
      %p216 = scmp.ne.s32.totalorder %s208, %s210
      %p217 = scmp.eq.s32.totalorder %s36, 1
      %p218 = por %p216, %p217
      %p219 = scmp.ne.s32.totalorder %s210, %s211
      %p220 = scmp.eq.s32.totalorder %s36, 0
      %p221 = por %p219, %p220
      %p222 = scmp.ne.s32.totalorder %s210, %s211
      %p223 = scmp.eq.s32.totalorder %s37, 1
      %p224 = por %p222, %p223
      %p226 = scmp.ne.s32.totalorder %s211, %s225
      %p227 = scmp.eq.s32.totalorder %s37, 0
      %p228 = por %p226, %p227
      %s230 = sadd.s32 %s229, 1
      %p233 = scmp.eq.s32.totalorder %s31, 1
      %p234 = scmp.ne.s32.totalorder %s229, %s231
      %p235 = scmp.eq.s32.totalorder %s31, 0
      %p236 = por %p234, %p235
      %p237 = scmp.ne.s32.totalorder %s229, %s231
      %p238 = scmp.eq.s32.totalorder %s36, 1
      %p239 = por %p237, %p238
      %p240 = scmp.ne.s32.totalorder %s231, %s232
      %p241 = scmp.eq.s32.totalorder %s36, 0
      %p242 = por %p240, %p241
      %p243 = scmp.ne.s32.totalorder %s231, %s232
      %p244 = scmp.eq.s32.totalorder %s37, 1
      %p245 = por %p243, %p244
      %p247 = scmp.ne.s32.totalorder %s232, %s246
      %p248 = scmp.eq.s32.totalorder %s37, 0
      %p249 = por %p247, %p248
      %s251 = sadd.s32 %s250, 1
      %p254 = scmp.eq.s32.totalorder %s31, 1
      %p255 = scmp.ne.s32.totalorder %s250, %s252
      %p256 = scmp.eq.s32.totalorder %s31, 0
      %p257 = por %p255, %p256
      %p258 = scmp.ne.s32.totalorder %s250, %s252
      %p259 = scmp.eq.s32.totalorder %s36, 1
      %p260 = por %p258, %p259
      %p261 = scmp.ne.s32.totalorder %s252, %s253
      %p262 = scmp.eq.s32.totalorder %s36, 0
      %p263 = por %p261, %p262
      %p264 = scmp.ne.s32.totalorder %s252, %s253
      %p265 = scmp.eq.s32.totalorder %s37, 1
      %p266 = por %p264, %p265
      %p268 = scmp.ne.s32.totalorder %s253, %s267
      %p269 = scmp.eq.s32.totalorder %s37, 0
      %p270 = por %p268, %p269
      %s272 = sadd.s32 %s271, 1
      %p275 = scmp.eq.s32.totalorder %s31, 1
      %p276 = scmp.ne.s32.totalorder %s271, %s273
      %p277 = scmp.eq.s32.totalorder %s31, 0
      %p278 = por %p276, %p277
      %p279 = scmp.ne.s32.totalorder %s271, %s273
      %p280 = scmp.eq.s32.totalorder %s36, 1
      %p281 = por %p279, %p280
      %p282 = scmp.ne.s32.totalorder %s273, %s274
      %p283 = scmp.eq.s32.totalorder %s36, 0
      %p284 = por %p282, %p283
      %p285 = scmp.ne.s32.totalorder %s273, %s274
      %p286 = scmp.eq.s32.totalorder %s37, 1
      %p287 = por %p285, %p286
      %p289 = scmp.ne.s32.totalorder %s274, %s288
      %p290 = scmp.eq.s32.totalorder %s37, 0
      %p291 = por %p289, %p290
      %s293 = sadd.s32 %s292, 1
      %p296 = scmp.eq.s32.totalorder %s31, 1
      %p297 = scmp.ne.s32.totalorder %s292, %s294
      %p298 = scmp.eq.s32.totalorder %s31, 0
      %p299 = por %p297, %p298
      %p300 = scmp.ne.s32.totalorder %s292, %s294
      %p301 = scmp.eq.s32.totalorder %s36, 1
      %p302 = por %p300, %p301
      %p303 = scmp.ne.s32.totalorder %s294, %s295
      %p304 = scmp.eq.s32.totalorder %s36, 0
      %p305 = por %p303, %p304
      %p306 = scmp.ne.s32.totalorder %s294, %s295
      %p307 = scmp.eq.s32.totalorder %s37, 1
      %p308 = por %p306, %p307
      %p310 = scmp.ne.s32.totalorder %s295, %s309
      %p311 = scmp.eq.s32.totalorder %s37, 0
      %p312 = por %p310, %p311
      %s314 = sadd.s32 %s313, 1
      %p317 = scmp.eq.s32.totalorder %s31, 1
      %p318 = scmp.ne.s32.totalorder %s313, %s315
      %p319 = scmp.eq.s32.totalorder %s31, 0
      %p320 = por %p318, %p319
      %p321 = scmp.ne.s32.totalorder %s313, %s315
      %p322 = scmp.eq.s32.totalorder %s36, 1
      %p323 = por %p321, %p322
      %p324 = scmp.ne.s32.totalorder %s315, %s316
      %p325 = scmp.eq.s32.totalorder %s36, 0
      %p326 = por %p324, %p325
      %p327 = scmp.ne.s32.totalorder %s315, %s316
      %p328 = scmp.eq.s32.totalorder %s37, 1
      %p329 = por %p327, %p328
      %p331 = scmp.ne.s32.totalorder %s316, %s330
      %p332 = scmp.eq.s32.totalorder %s37, 0
      %p333 = por %p331, %p332
      %s335 = sadd.s32 %s334, 1
      %p338 = scmp.eq.s32.totalorder %s31, 1
      %p339 = scmp.ne.s32.totalorder %s334, %s336
      %p340 = scmp.eq.s32.totalorder %s31, 0
      %p341 = por %p339, %p340
      %p342 = scmp.ne.s32.totalorder %s334, %s336
      %p343 = scmp.eq.s32.totalorder %s36, 1
      %p344 = por %p342, %p343
      %p345 = scmp.ne.s32.totalorder %s336, %s337
      %p346 = scmp.eq.s32.totalorder %s36, 0
      %p347 = por %p345, %p346
      %p348 = scmp.ne.s32.totalorder %s336, %s337
      %p349 = scmp.eq.s32.totalorder %s37, 1
      %p350 = por %p348, %p349
      %p352 = scmp.ne.s32.totalorder %s337, %s351
      %p353 = scmp.eq.s32.totalorder %s37, 0
      %p354 = por %p352, %p353
      %s356 = sadd.s32 %s355, 1
      %p359 = scmp.eq.s32.totalorder %s31, 1
      %p360 = scmp.ne.s32.totalorder %s355, %s357
      %p361 = scmp.eq.s32.totalorder %s31, 0
      %p362 = por %p360, %p361
      %p363 = scmp.ne.s32.totalorder %s355, %s357
      %p364 = scmp.eq.s32.totalorder %s36, 1
      %p365 = por %p363, %p364
      %p366 = scmp.ne.s32.totalorder %s357, %s358
      %p367 = scmp.eq.s32.totalorder %s36, 0
      %p368 = por %p366, %p367
      %p369 = scmp.ne.s32.totalorder %s357, %s358
      %p370 = scmp.eq.s32.totalorder %s37, 1
      %p371 = por %p369, %p370
      %p373 = scmp.ne.s32.totalorder %s358, %s372
      %p374 = scmp.eq.s32.totalorder %s37, 0
      %p375 = por %p373, %p374
      %s376 = ssub.s32 %s39, %s46
      %p377 = scmp.eq.s32.totalorder %s376, 0
      %s379 = sadd.s32 %s378, 1
      %s380 = scalar_select %p377, %s378, %s379
      %p383 = pneg %p377
      %p384 = scmp.eq.s32.totalorder %s31, 1
      %p385 = por %p383, %p384
      %p386 = scmp.ne.s32.totalorder %s378, %s381
      %p387 = scmp.eq.s32.totalorder %s31, 0
      %p388 = por %p386, %p387
      %p389 = scmp.ne.s32.totalorder %s378, %s381
      %p390 = scmp.eq.s32.totalorder %s36, 1
      %p391 = por %p389, %p390
      %p392 = scmp.ne.s32.totalorder %s381, %s382
      %p393 = scmp.eq.s32.totalorder %s36, 0
      %p394 = por %p392, %p393
      %p395 = scmp.ne.s32.totalorder %s381, %s382
      %p396 = scmp.eq.s32.totalorder %s37, 1
      %p397 = por %p395, %p396
      %p399 = scmp.ne.s32.totalorder %s382, %s398
      %p400 = scmp.eq.s32.totalorder %s37, 0
      %p401 = por %p399, %p400
      %s402 = ssub.s32 %s39, %s46
      %p403 = scmp.eq.s32.totalorder %s402, 0
      %s405 = sadd.s32 %s404, 1
      %s406 = scalar_select %p403, %s404, %s405
      %p409 = pneg %p403
      %p410 = scmp.eq.s32.totalorder %s31, 1
      %p411 = por %p409, %p410
      %p412 = scmp.ne.s32.totalorder %s404, %s407
      %p413 = scmp.eq.s32.totalorder %s31, 0
      %p414 = por %p412, %p413
      %p415 = scmp.ne.s32.totalorder %s404, %s407
      %p416 = scmp.eq.s32.totalorder %s36, 1
      %p417 = por %p415, %p416
      %p418 = scmp.ne.s32.totalorder %s407, %s408
      %p419 = scmp.eq.s32.totalorder %s36, 0
      %p420 = por %p418, %p419
      %p421 = scmp.ne.s32.totalorder %s407, %s408
      %p422 = scmp.eq.s32.totalorder %s37, 1
      %p423 = por %p421, %p422
      %p425 = scmp.ne.s32.totalorder %s408, %s424
      %p426 = scmp.eq.s32.totalorder %s37, 0
      %p427 = por %p425, %p426
      %s428 = ssub.s32 %s38, %s50
      %s429 = ssub.s32 %s39, %s46
      %s430 = sor.u32 %s428, %s429
      %p431 = scmp.eq.s32.totalorder %s430, 0
      %s433 = sadd.s32 %s432, 1
      %s434 = scalar_select %p431, %s432, %s433
      %p437 = pneg %p431
      %p438 = scmp.eq.s32.totalorder %s31, 1
      %p439 = por %p437, %p438
      %p440 = scmp.ne.s32.totalorder %s432, %s435
      %p441 = scmp.eq.s32.totalorder %s31, 0
      %p442 = por %p440, %p441
      %p443 = scmp.ne.s32.totalorder %s432, %s435
      %p444 = scmp.eq.s32.totalorder %s36, 1
      %p445 = por %p443, %p444
      %p446 = scmp.ne.s32.totalorder %s435, %s436
      %p447 = scmp.eq.s32.totalorder %s36, 0
      %p448 = por %p446, %p447
      %p449 = scmp.ne.s32.totalorder %s435, %s436
      %p450 = scmp.eq.s32.totalorder %s37, 1
      %p451 = por %p449, %p450
      %p453 = scmp.ne.s32.totalorder %s436, %s452
      %p454 = scmp.eq.s32.totalorder %s37, 0
      %p455 = por %p453, %p454
      %p456 = scmp.le.s32.totalorder 1, %s31
      %p457 = scmp.lt.s32.totalorder %s31, 3
      %p458 = pnand %p456, %p457
      %p459 = pneg %p458
      // Predicated region
      $region9: #{tpu_custom_call.1} parent=5 // pred_check
        _
      $region10: #{tpu_custom_call.1} parent=5 // pred_check_branch
        %461 = sbr.rel (%p458) target = $region12
      $region11: #{tpu_custom_call.1} parent=5 // pred_region
        %s462 = ssub.s32 %s31, 1
        // Predicated region
        $region13: #{tpu_custom_call.1} parent=11 // pred_check
          %p463 = pneg %p116
        $region14: #{tpu_custom_call.1} parent=11 // pred_check_branch
          %465 = sbr.rel (%p463) target = $region16
        $region15: #{tpu_custom_call.1} parent=11 // pred_region
          _
        $region16: #{tpu_custom_call.1} parent=11 // pred_fallthru
          _
        // Predicated region
        $region17: #{tpu_custom_call.1} parent=11 // pred_check
          %p466 = pneg %p137
        $region18: #{tpu_custom_call.1} parent=11 // pred_check_branch
          %468 = sbr.rel (%p466) target = $region20
        $region19: #{tpu_custom_call.1} parent=11 // pred_region
          _
        $region20: #{tpu_custom_call.1} parent=11 // pred_fallthru
          _
        // Predicated region
        $region21: #{tpu_custom_call.1} parent=11 // pred_check
          %p469 = pneg %p158
        $region22: #{tpu_custom_call.1} parent=11 // pred_check_branch
          %471 = sbr.rel (%p469) target = $region24
        $region23: #{tpu_custom_call.1} parent=11 // pred_region
          _
        $region24: #{tpu_custom_call.1} parent=11 // pred_fallthru
          _
        // Predicated region
        $region25: #{tpu_custom_call.1} parent=11 // pred_check
          %p472 = pneg %p179
        $region26: #{tpu_custom_call.1} parent=11 // pred_check_branch
          %474 = sbr.rel (%p472) target = $region28
        $region27: #{tpu_custom_call.1} parent=11 // pred_region
          _
        $region28: #{tpu_custom_call.1} parent=11 // pred_fallthru
          _
        // Predicated region
        $region29: #{tpu_custom_call.1} parent=11 // pred_check
          %p475 = pneg %p200
        $region30: #{tpu_custom_call.1} parent=11 // pred_check_branch
          %477 = sbr.rel (%p475) target = $region32
        $region31: #{tpu_custom_call.1} parent=11 // pred_region
          %s479 = ssub.s32 8192, 8192
          %480 = vsyncadd [#allocation7], %s479
          %s481 = sshll.u32 [#allocation6], 4
          %s482 = int_to_ptr.vmem [resolvable:$true] %s481
          %487 = dma.hbm_to_vmem [thread:$0]  %s6, 8192, %s482, [#allocation7], 256, 256, 16
        $region32: #{tpu_custom_call.1} parent=11 // pred_fallthru
          _
        // Predicated region
        $region33: #{tpu_custom_call.1} parent=11 // pred_check
          %p488 = pneg %p221
        $region34: #{tpu_custom_call.1} parent=11 // pred_check_branch
          %490 = sbr.rel (%p488) target = $region36
        $region35: #{tpu_custom_call.1} parent=11 // pred_region
          _
        $region36: #{tpu_custom_call.1} parent=11 // pred_fallthru
          _
        // Predicated region
        $region37: #{tpu_custom_call.1} parent=11 // pred_check
          %p491 = pneg %p242
        $region38: #{tpu_custom_call.1} parent=11 // pred_check_branch
          %493 = sbr.rel (%p491) target = $region40
        $region39: #{tpu_custom_call.1} parent=11 // pred_region
          _
        $region40: #{tpu_custom_call.1} parent=11 // pred_fallthru
          _
        // Predicated region
        $region41: #{tpu_custom_call.1} parent=11 // pred_check
          %p494 = pneg %p263
        $region42: #{tpu_custom_call.1} parent=11 // pred_check_branch
          %496 = sbr.rel (%p494) target = $region44
        $region43: #{tpu_custom_call.1} parent=11 // pred_region
          _
        $region44: #{tpu_custom_call.1} parent=11 // pred_fallthru
          _
        // Predicated region
        $region45: #{tpu_custom_call.1} parent=11 // pred_check
          %p497 = pneg %p284
        $region46: #{tpu_custom_call.1} parent=11 // pred_check_branch
          %499 = sbr.rel (%p497) target = $region48
        $region47: #{tpu_custom_call.1} parent=11 // pred_region
          %s501 = ssub.s32 4096, 4096
          %502 = vsyncadd [#allocation7], %s501
          %s503 = sshll.u32 [#allocation8], 4
          %s504 = int_to_ptr.vmem [resolvable:$true] %s503
          %509 = dma.hbm_to_vmem [thread:$0]  %s10, 4096, %s504, [#allocation7], 64, 64, 4
        $region48: #{tpu_custom_call.1} parent=11 // pred_fallthru
          _
        // Predicated region
        $region49: #{tpu_custom_call.1} parent=11 // pred_check
          %p510 = pneg %p305
        $region50: #{tpu_custom_call.1} parent=11 // pred_check_branch
          %512 = sbr.rel (%p510) target = $region52
        $region51: #{tpu_custom_call.1} parent=11 // pred_region
          _
        $region52: #{tpu_custom_call.1} parent=11 // pred_fallthru
          _
        // Predicated region
        $region53: #{tpu_custom_call.1} parent=11 // pred_check
          %p513 = pneg %p326
        $region54: #{tpu_custom_call.1} parent=11 // pred_check_branch
          %515 = sbr.rel (%p513) target = $region56
        $region55: #{tpu_custom_call.1} parent=11 // pred_region
          _
        $region56: #{tpu_custom_call.1} parent=11 // pred_fallthru
          _
        // Predicated region
        $region57: #{tpu_custom_call.1} parent=11 // pred_check
          %p516 = pneg %p347
        $region58: #{tpu_custom_call.1} parent=11 // pred_check_branch
          %518 = sbr.rel (%p516) target = $region60
        $region59: #{tpu_custom_call.1} parent=11 // pred_region
          %s520 = ssub.s32 1024, 1024
          %521 = vsyncadd [#allocation10], %s520
          %s522 = sshll.u32 [#allocation9], 4
          %s523 = int_to_ptr.vmem [resolvable:$true] %s522
          %528 = dma.hbm_to_vmem [thread:$0]  %s13, 1024, %s523, [#allocation10], 64, 64, 4
        $region60: #{tpu_custom_call.1} parent=11 // pred_fallthru
          _
        // Predicated region
        $region61: #{tpu_custom_call.1} parent=11 // pred_check
          %p529 = pneg %p368
        $region62: #{tpu_custom_call.1} parent=11 // pred_check_branch
          %531 = sbr.rel (%p529) target = $region64
        $region63: #{tpu_custom_call.1} parent=11 // pred_region
          _
        $region64: #{tpu_custom_call.1} parent=11 // pred_fallthru
          _
        // Predicated region
        $region65: #{tpu_custom_call.1} parent=11 // pred_check
          %p532 = pneg %p394
        $region66: #{tpu_custom_call.1} parent=11 // pred_check_branch
          %534 = sbr.rel (%p532) target = $region68
        $region67: #{tpu_custom_call.1} parent=11 // pred_region
          %s535 = smul.u32 4, %s41
          %s537 = ssub.s32 4096, 4096
          %538 = vsyncadd [#allocation10], %s537
          %s539 = smul.addr %s535, 64
          %s540 = scalar_lea.hbm %s15, %s539
          %s541 = sshll.u32 [#allocation11], 4
          %s542 = int_to_ptr.vmem [resolvable:$true] %s541
          %547 = dma.hbm_to_vmem [thread:$0]  %s540, 4096, %s542, [#allocation10], 256, 256, 16
        $region68: #{tpu_custom_call.1} parent=11 // pred_fallthru
          _
        // Predicated region
        $region69: #{tpu_custom_call.1} parent=11 // pred_check
          %p548 = pneg %p420
        $region70: #{tpu_custom_call.1} parent=11 // pred_check_branch
          %550 = sbr.rel (%p548) target = $region72
        $region71: #{tpu_custom_call.1} parent=11 // pred_region
          %s551 = smul.u32 4, %s41
          %p552 = scmp.lt.s32.totalorder %s551, 3
          %s553 = scalar_select %p552, %s551, 3
          %s554 = scalar_lea.vmem %s16, %s553
          %s555 = smul.u32 4, %s41
        $region72: #{tpu_custom_call.1} parent=11 // pred_fallthru
          _
      $region12: #{tpu_custom_call.1} parent=5 // pred_fallthru
        _
      %p556 = scmp.lt.s32.totalorder %s31, 2
      // Predicated region
      $region73: #{tpu_custom_call.1} parent=5 // pred_check
        %p557 = pneg %p556
      $region74: #{tpu_custom_call.1} parent=5 // pred_check_branch
        %559 = sbr.rel (%p557) target = $region76
      $region75: #{tpu_custom_call.1} parent=5 // pred_region
        // Predicated region
        $region77: #{tpu_custom_call.1} parent=75 // pred_check
          %p560 = pneg %p63
        $region78: #{tpu_custom_call.1} parent=75 // pred_check_branch
          %562 = sbr.rel (%p560) target = $region80
        $region79: #{tpu_custom_call.1} parent=75 // pred_region
          %s563 = sand.u32 %s53, 1
          %s564 = scalar_lea.sflag [#allocation4], %s563
          %s565 = sand.u32 %s53, 1
          %s566 = smul.addr %s565, 64
          %s567 = scalar_lea.vmem [#allocation3], %s566
          %s568 = smul.u32 4, %s38
          %s570 = ssub.s32 1024, 1024
          %571 = vsyncadd %s564, %s570
          %s572 = smul.addr %s568, 2
          %s573 = smul.addr %s572, 128
          %s574 = scalar_lea.hbm %s0, %s573
          %s575 = sshll.u32 %s567, 4
          %s576 = int_to_ptr.vmem [resolvable:$true] %s575
          %581 = dma.hbm_to_vmem [thread:$0]  %s574, 1024, %s576, %s564, 256, 256, 16
        $region80: #{tpu_custom_call.1} parent=75 // pred_fallthru
          _
        // Predicated region
        $region81: #{tpu_custom_call.1} parent=75 // pred_check
          %p582 = pneg %p89
        $region82: #{tpu_custom_call.1} parent=75 // pred_check_branch
          %584 = sbr.rel (%p582) target = $region84
        $region83: #{tpu_custom_call.1} parent=75 // pred_region
          %s585 = smul.u32 4, %s38
          %p586 = scmp.lt.s32.totalorder %s585, 7
          %s587 = scalar_select %p586, %s585, 7
          %s588 = smul.addr %s587, 8
          %s589 = scalar_lea.vmem %s1, %s588
          %s590 = smul.u32 4, %s38
        $region84: #{tpu_custom_call.1} parent=75 // pred_fallthru
          _
      $region76: #{tpu_custom_call.1} parent=5 // pred_fallthru
        _
      %p591 = scmp.le.s32.totalorder 1, %s31
      %p592 = scmp.lt.s32.totalorder %s31, 3
      %p593 = pnand %p591, %p592
      %p594 = pneg %p593
      // Predicated region
      $region85: #{tpu_custom_call.1} parent=5 // pred_check
        _
      $region86: #{tpu_custom_call.1} parent=5 // pred_check_branch
        %596 = sbr.rel (%p593) target = $region88
      $region87: #{tpu_custom_call.1} parent=5 // pred_region
        %s597 = ssub.s32 %s31, 1
        %s598 = sand.u32 %s56, 1
        %s599 = scalar_lea.sflag [#allocation4], %s598
        %s600 = sand.u32 %s56, 1
        %s601 = smul.addr %s600, 64
        %s602 = scalar_lea.vmem [#allocation3], %s601
        // Predicated region
        $region89: #{tpu_custom_call.1} parent=87 // pred_check
          %p603 = pneg %p69
        $region90: #{tpu_custom_call.1} parent=87 // pred_check_branch
          %605 = sbr.rel (%p603) target = $region92
        $region91: #{tpu_custom_call.1} parent=87 // pred_region
          %606 = dma.done %s599, 1024
        $region92: #{tpu_custom_call.1} parent=87 // pred_fallthru
          _
        // Predicated region
        $region93: #{tpu_custom_call.1} parent=87 // pred_check
          %p607 = pneg %p200
        $region94: #{tpu_custom_call.1} parent=87 // pred_check_branch
          %609 = sbr.rel (%p607) target = $region96
        $region95: #{tpu_custom_call.1} parent=87 // pred_region
          %610 = dma.done [#allocation7], 8192
        $region96: #{tpu_custom_call.1} parent=87 // pred_fallthru
          _
        // Predicated region
        $region97: #{tpu_custom_call.1} parent=87 // pred_check
          %p611 = pneg %p284
        $region98: #{tpu_custom_call.1} parent=87 // pred_check_branch
          %613 = sbr.rel (%p611) target = $region100
        $region99: #{tpu_custom_call.1} parent=87 // pred_region
          %614 = dma.done [#allocation7], 4096
        $region100: #{tpu_custom_call.1} parent=87 // pred_fallthru
          _
        // Predicated region
        $region101: #{tpu_custom_call.1} parent=87 // pred_check
          %p615 = pneg %p347
        $region102: #{tpu_custom_call.1} parent=87 // pred_check_branch
          %617 = sbr.rel (%p615) target = $region104
        $region103: #{tpu_custom_call.1} parent=87 // pred_region
          %618 = dma.done [#allocation10], 1024
        $region104: #{tpu_custom_call.1} parent=87 // pred_fallthru
          _
        // Predicated region
        $region105: #{tpu_custom_call.1} parent=87 // pred_check
          %p619 = pneg %p394
        $region106: #{tpu_custom_call.1} parent=87 // pred_check_branch
          %621 = sbr.rel (%p619) target = $region108
        $region107: #{tpu_custom_call.1} parent=87 // pred_region
          %622 = dma.done [#allocation10], 4096
        $region108: #{tpu_custom_call.1} parent=87 // pred_fallthru
          _
        %s623 = sand.u32 %s56, 1
        %s624 = scalar_lea.sflag [#allocation4], %s623
        %s625 = sand.u32 %s56, 1
        %s626 = smul.addr %s625, 64
        %s627 = scalar_lea.vmem [#allocation3], %s626
        %p628 = pneg %p69
        %p629 = pneg %p66
        %s630 = smul.u32 4, %s40
        %p631 = scmp.lt.s32.totalorder %s630, 7
        %s632 = scalar_select %p631, %s630, 7
        %s633 = smul.addr %s632, 8
        %s634 = scalar_lea.vmem %s1, %s633
        %p635 = pneg %p95
        %p636 = pneg %p92
        %p637 = pneg %p116
        %p638 = pneg %p113
        %p639 = pneg %p137
        %p640 = pneg %p134
        %p641 = pneg %p158
        %p642 = pneg %p155
        %p643 = pneg %p179
        %p644 = pneg %p176
        %p645 = pneg %p200
        %p646 = pneg %p197
        %p647 = pneg %p221
        %p648 = pneg %p218
        %p649 = pneg %p242
        %p650 = pneg %p239
        %p651 = pneg %p263
        %p652 = pneg %p260
        %p653 = pneg %p284
        %p654 = pneg %p281
        %p655 = pneg %p305
        %p656 = pneg %p302
        %p657 = pneg %p326
        %p658 = pneg %p323
        %p659 = pneg %p347
        %p660 = pneg %p344
        %p661 = pneg %p368
        %p662 = pneg %p365
        %p663 = pneg %p394
        %p664 = pneg %p391
        %s665 = smul.u32 4, %s41
        %p666 = scmp.lt.s32.totalorder %s665, 3
        %s667 = scalar_select %p666, %s665, 3
        %s668 = scalar_lea.vmem %s16, %s667
        %p669 = pneg %p420
        %p670 = pneg %p417
        %p671 = pneg %p448
        %p672 = pneg %p445
        %s673 = sand.u32 %s435, 1
        %s674 = scalar_lea.sflag [#allocation5], %s673
        %s675 = sand.u32 %s435, 1
        %s676 = smul.addr %s675, 64
        %s677 = scalar_lea.vmem [#allocation12], %s676
        %s678 = smul.u32 4, %s40
        %s679 = smul.u32 4, %s40
        %p680 = scmp.lt.s32.totalorder %s679, 7
        %s681 = scalar_select %p680, %s679, 7
        %s682 = smul.addr %s681, 8
        %s683 = scalar_lea.vmem %s1, %s682
        %s684 = smul.u32 4, %s40
        %s685 = smul.u32 4, %s41
        %s686 = smul.u32 4, %s41
        %p687 = scmp.lt.s32.totalorder %s686, 3
        %s688 = scalar_select %p687, %s686, 3
        %s689 = scalar_lea.vmem %s16, %s688
        %s690 = smul.u32 4, %s41
        %s691 = smul.u32 4, %s40
        %s692 = smul.u32 4, %s41
        %p694 = scmp.eq.s32.totalorder %s41, 0
        // Predicated region
        $region109: #{tpu_custom_call.1} parent=87 // pred_check
          %p695 = pneg %p694
        $region110: #{tpu_custom_call.1} parent=87 // pred_check_branch
          %697 = sbr.rel (%p695) target = $region112
        $region111: #{tpu_custom_call.1} parent=87 // pred_region
          %v698 = vld [vmem:[%s602] sm:$0xff]
          %v699 = vld [vmem:[%s602 + $0x8] sm:$0xff]
          %v700 = vld [vmem:[%s602 + $0x10] sm:$0xff]
          %v701 = vld [vmem:[%s602 + $0x18] sm:$0xff]
          %v702 = vld [vmem:[%s602 + $0x20] sm:$0xff]
          %v703 = vld [vmem:[%s602 + $0x28] sm:$0xff]
          %v704 = vld [vmem:[%s602 + $0x30] sm:$0xff]
          %v705 = vld [vmem:[%s602 + $0x38] sm:$0xff]
          %v706 = vld [vmem:[%s2] sm:$0x3]
          %v707 = vld [vmem:[%s3] sm:$0x3]
          %v708 = vadd.f32 %v698, %v699
          %709 = vadd.xlane.f32.xlu0 %v708
          %v710 = vpop.xlane.xlu0 %709
          %v711 = vadd.f32 %v700, %v701
          %712 = vadd.xlane.f32.xlu0 %v711
          %v713 = vpop.xlane.xlu0 %712
          %v714 = vadd.f32 %v702, %v703
          %715 = vadd.xlane.f32.xlu0 %v714
          %v716 = vpop.xlane.xlu0 %715
          %v717 = vadd.f32 %v704, %v705
          %718 = vadd.xlane.f32.xlu0 %v717
          %v719 = vpop.xlane.xlu0 %718
          %v720 = vrcp.pop 256.0
          %v721 = vmul.f32 %v710, %v720
          %v722 = vmul.f32 %v713, %v720
          %v723 = vmul.f32 %v716, %v720
          %v724 = vmul.f32 %v719, %v720
          %v725 = vsub.f32 %v698, %v721
          %v726 = vsub.f32 %v699, %v721
          %v727 = vsub.f32 %v700, %v722
          %v728 = vsub.f32 %v701, %v722
          %v729 = vsub.f32 %v702, %v723
          %v730 = vsub.f32 %v703, %v723
          %v731 = vsub.f32 %v704, %v724
          %v732 = vsub.f32 %v705, %v724
          %v733 = vmul.f32 %v725, %v725
          %v734 = vmul.f32 %v726, %v726
          %v735 = vmul.f32 %v727, %v727
          %v736 = vmul.f32 %v728, %v728
          %v737 = vmul.f32 %v729, %v729
          %v738 = vmul.f32 %v730, %v730
          %v739 = vmul.f32 %v731, %v731
          %v740 = vmul.f32 %v732, %v732
          %v741 = vadd.f32 %v733, %v734
          %742 = vadd.xlane.f32.xlu0 %v741
          %v743 = vpop.xlane.xlu0 %742
          %v744 = vadd.f32 %v735, %v736
          %745 = vadd.xlane.f32.xlu0 %v744
          %v746 = vpop.xlane.xlu0 %745
          %v747 = vadd.f32 %v737, %v738
          %748 = vadd.xlane.f32.xlu0 %v747
          %v749 = vpop.xlane.xlu0 %748
          %v750 = vadd.f32 %v739, %v740
          %751 = vadd.xlane.f32.xlu0 %v750
          %v752 = vpop.xlane.xlu0 %751
          %v753 = vmul.f32 %v743, %v720
          %v754 = vmul.f32 %v746, %v720
          %v755 = vmul.f32 %v749, %v720
          %v756 = vmul.f32 %v752, %v720
          %v757 = vadd.f32 %v753, 1e-05
          %v758 = vadd.f32 %v754, 1e-05
          %v759 = vadd.f32 %v755, 1e-05
          %v760 = vadd.f32 %v756, 1e-05
          %v761 = vrsqrt.pop %v757
          %v762 = vrsqrt.pop %v758
          %v763 = vrsqrt.pop %v759
          %v764 = vrsqrt.pop %v760
          %v765 = vmul.f32 %v725, %v761
          %v766 = vmul.f32 %v726, %v761
          %v767 = vmul.f32 %v727, %v762
          %v768 = vmul.f32 %v728, %v762
          %v769 = vmul.f32 %v729, %v763
          %v770 = vmul.f32 %v730, %v763
          %v771 = vmul.f32 %v731, %v764
          %v772 = vmul.f32 %v732, %v764
          %v774 = vlaneseq
          %v775 = vshrl.u32 %v774, 7
          %v776 = vsub.s32 0, %v775
          %v777 = vrot.slane %v706, %v776
          %v778 = vlaneseq
          %v779 = vshrl.u32 %v778, 7
          %v780 = vsub.s32 1, %v779
          %v781 = vrot.slane %v706, %v780
          %v784 = vmul.f32 %v765, %v777
          %v785 = vmul.f32 %v766, %v781
          %v786 = vmul.f32 %v767, %v777
          %v787 = vmul.f32 %v768, %v781
          %v788 = vmul.f32 %v769, %v777
          %v789 = vmul.f32 %v770, %v781
          %v790 = vmul.f32 %v771, %v777
          %v791 = vmul.f32 %v772, %v781
          %v793 = vlaneseq
          %v794 = vshrl.u32 %v793, 7
          %v795 = vsub.s32 0, %v794
          %v796 = vrot.slane %v707, %v795
          %v797 = vlaneseq
          %v798 = vshrl.u32 %v797, 7
          %v799 = vsub.s32 1, %v798
          %v800 = vrot.slane %v707, %v799
          %v803 = vadd.f32 %v784, %v796
          %v804 = vadd.f32 %v785, %v800
          %v805 = vadd.f32 %v786, %v796
          %v806 = vadd.f32 %v787, %v800
          %v807 = vadd.f32 %v788, %v796
          %v808 = vadd.f32 %v789, %v800
          %v809 = vadd.f32 %v790, %v796
          %v810 = vadd.f32 %v791, %v800
          %v811 = vpack.c.bf16 %v805, %v803
          %v812 = vpack.c.bf16 %v806, %v804
          %v813 = vpack.c.bf16 %v809, %v807
          %v814 = vpack.c.bf16 %v810, %v808
          %v815 = vld [vmem:[#allocation6] sm:$0xff]
          %v816 = vld [vmem:[#allocation6 + $0x8] sm:$0xff]
          %v817 = vld [vmem:[#allocation6 + $0x10] sm:$0xff]
          %v818 = vld [vmem:[#allocation6 + $0x18] sm:$0xff]
          %v819 = vld [vmem:[#allocation6 + $0x20] sm:$0xff]
          %v820 = vld [vmem:[#allocation6 + $0x28] sm:$0xff]
          %v821 = vld [vmem:[#allocation6 + $0x30] sm:$0xff]
          %v822 = vld [vmem:[#allocation6 + $0x38] sm:$0xff]
          %v823 = vld [vmem:[#allocation6 + $0x40] sm:$0xff]
          %v824 = vld [vmem:[#allocation6 + $0x48] sm:$0xff]
          %v825 = vld [vmem:[#allocation6 + $0x50] sm:$0xff]
          %v826 = vld [vmem:[#allocation6 + $0x58] sm:$0xff]
          %v827 = vld [vmem:[#allocation6 + $0x60] sm:$0xff]
          %v828 = vld [vmem:[#allocation6 + $0x68] sm:$0xff]
          %v829 = vld [vmem:[#allocation6 + $0x70] sm:$0xff]
          %v830 = vld [vmem:[#allocation6 + $0x78] sm:$0xff]
          %v831 = vld [vmem:[#allocation6 + $0x80] sm:$0xff]
          %v832 = vld [vmem:[#allocation6 + $0x88] sm:$0xff]
          %v833 = vld [vmem:[#allocation6 + $0x90] sm:$0xff]
          %v834 = vld [vmem:[#allocation6 + $0x98] sm:$0xff]
          %v835 = vld [vmem:[#allocation6 + $0xa0] sm:$0xff]
          %v836 = vld [vmem:[#allocation6 + $0xa8] sm:$0xff]
          %v837 = vld [vmem:[#allocation6 + $0xb0] sm:$0xff]
          %v838 = vld [vmem:[#allocation6 + $0xb8] sm:$0xff]
          %v839 = vld [vmem:[#allocation6 + $0xc0] sm:$0xff]
          %v840 = vld [vmem:[#allocation6 + $0xc8] sm:$0xff]
          %v841 = vld [vmem:[#allocation6 + $0xd0] sm:$0xff]
          %v842 = vld [vmem:[#allocation6 + $0xd8] sm:$0xff]
          %v843 = vld [vmem:[#allocation6 + $0xe0] sm:$0xff]
          %v844 = vld [vmem:[#allocation6 + $0xe8] sm:$0xff]
          %v845 = vld [vmem:[#allocation6 + $0xf0] sm:$0xff]
          %v846 = vld [vmem:[#allocation6 + $0xf8] sm:$0xff]
          %v847 = vld [vmem:[#allocation6 + $0x100] sm:$0xff]
          %v848 = vld [vmem:[#allocation6 + $0x108] sm:$0xff]
          %v849 = vld [vmem:[#allocation6 + $0x110] sm:$0xff]
          %v850 = vld [vmem:[#allocation6 + $0x118] sm:$0xff]
          %v851 = vld [vmem:[#allocation6 + $0x120] sm:$0xff]
          %v852 = vld [vmem:[#allocation6 + $0x128] sm:$0xff]
          %v853 = vld [vmem:[#allocation6 + $0x130] sm:$0xff]
          %v854 = vld [vmem:[#allocation6 + $0x138] sm:$0xff]
          %v855 = vld [vmem:[#allocation6 + $0x140] sm:$0xff]
          %v856 = vld [vmem:[#allocation6 + $0x148] sm:$0xff]
          %v857 = vld [vmem:[#allocation6 + $0x150] sm:$0xff]
          %v858 = vld [vmem:[#allocation6 + $0x158] sm:$0xff]
          %v859 = vld [vmem:[#allocation6 + $0x160] sm:$0xff]
          %v860 = vld [vmem:[#allocation6 + $0x168] sm:$0xff]
          %v861 = vld [vmem:[#allocation6 + $0x170] sm:$0xff]
          %v862 = vld [vmem:[#allocation6 + $0x178] sm:$0xff]
          %v863 = vld [vmem:[#allocation6 + $0x180] sm:$0xff]
          %v864 = vld [vmem:[#allocation6 + $0x188] sm:$0xff]
          %v865 = vld [vmem:[#allocation6 + $0x190] sm:$0xff]
          %v866 = vld [vmem:[#allocation6 + $0x198] sm:$0xff]
          %v867 = vld [vmem:[#allocation6 + $0x1a0] sm:$0xff]
          %v868 = vld [vmem:[#allocation6 + $0x1a8] sm:$0xff]
          %v869 = vld [vmem:[#allocation6 + $0x1b0] sm:$0xff]
          %v870 = vld [vmem:[#allocation6 + $0x1b8] sm:$0xff]
          %v871 = vld [vmem:[#allocation6 + $0x1c0] sm:$0xff]
          %v872 = vld [vmem:[#allocation6 + $0x1c8] sm:$0xff]
          %v873 = vld [vmem:[#allocation6 + $0x1d0] sm:$0xff]
          %v874 = vld [vmem:[#allocation6 + $0x1d8] sm:$0xff]
          %v875 = vld [vmem:[#allocation6 + $0x1e0] sm:$0xff]
          %v876 = vld [vmem:[#allocation6 + $0x1e8] sm:$0xff]
          %v877 = vld [vmem:[#allocation6 + $0x1f0] sm:$0xff]
          %v878 = vld [vmem:[#allocation6 + $0x1f8] sm:$0xff]
          %v879 = vld [vmem:[%s7] sm:$0xf]
          %v881 = vlaneseq
          %v882 = vshrl.u32 %v881, 7
          %v883 = vsub.s32 0, %v882
          %v884 = vrot.slane %v879, %v883
          %v885 = vlaneseq
          %v886 = vshrl.u32 %v885, 7
          %v887 = vsub.s32 1, %v886
          %v888 = vrot.slane %v879, %v887
          %v889 = vlaneseq
          %v890 = vshrl.u32 %v889, 7
          %v891 = vsub.s32 2, %v890
          %v892 = vrot.slane %v879, %v891
          %v893 = vlaneseq
          %v894 = vshrl.u32 %v893, 7
          %v895 = vsub.s32 3, %v894
          %v896 = vrot.slane %v879, %v895
          %v965 = vunpack.c.l.b16 %v815
          %v966 = vunpack.c.h.b16 %v815
          %v967 = vunpack.c.l.b16 %v816
          %v968 = vunpack.c.h.b16 %v816
          %v969 = vunpack.c.l.b16 %v817
          %v970 = vunpack.c.h.b16 %v817
          %v971 = vunpack.c.l.b16 %v818
          %v972 = vunpack.c.h.b16 %v818
          %v973 = vunpack.c.l.b16 %v819
          %v974 = vunpack.c.h.b16 %v819
          %v975 = vunpack.c.l.b16 %v820
          %v976 = vunpack.c.h.b16 %v820
          %v977 = vunpack.c.l.b16 %v821
          %v978 = vunpack.c.h.b16 %v821
          %v979 = vunpack.c.l.b16 %v822
          %v980 = vunpack.c.h.b16 %v822
          %v981 = vunpack.c.l.b16 %v823
          %v982 = vunpack.c.h.b16 %v823
          %v983 = vunpack.c.l.b16 %v824
          %v984 = vunpack.c.h.b16 %v824
          %v985 = vunpack.c.l.b16 %v825
          %v986 = vunpack.c.h.b16 %v825
          %v987 = vunpack.c.l.b16 %v826
          %v988 = vunpack.c.h.b16 %v826
          %v989 = vunpack.c.l.b16 %v827
          %v990 = vunpack.c.h.b16 %v827
          %v991 = vunpack.c.l.b16 %v828
          %v992 = vunpack.c.h.b16 %v828
          %v993 = vunpack.c.l.b16 %v829
          %v994 = vunpack.c.h.b16 %v829
          %v995 = vunpack.c.l.b16 %v830
          %v996 = vunpack.c.h.b16 %v830
          %v997 = vunpack.c.l.b16 %v831
          %v998 = vunpack.c.h.b16 %v831
          %v999 = vunpack.c.l.b16 %v832
          %v1000 = vunpack.c.h.b16 %v832
          %v1001 = vunpack.c.l.b16 %v833
          %v1002 = vunpack.c.h.b16 %v833
          %v1003 = vunpack.c.l.b16 %v834
          %v1004 = vunpack.c.h.b16 %v834
          %v1005 = vunpack.c.l.b16 %v835
          %v1006 = vunpack.c.h.b16 %v835
          %v1007 = vunpack.c.l.b16 %v836
          %v1008 = vunpack.c.h.b16 %v836
          %v1009 = vunpack.c.l.b16 %v837
          %v1010 = vunpack.c.h.b16 %v837
          %v1011 = vunpack.c.l.b16 %v838
          %v1012 = vunpack.c.h.b16 %v838
          %v1013 = vunpack.c.l.b16 %v839
          %v1014 = vunpack.c.h.b16 %v839
          %v1015 = vunpack.c.l.b16 %v840
          %v1016 = vunpack.c.h.b16 %v840
          %v1017 = vunpack.c.l.b16 %v841
          %v1018 = vunpack.c.h.b16 %v841
          %v1019 = vunpack.c.l.b16 %v842
          %v1020 = vunpack.c.h.b16 %v842
          %v1021 = vunpack.c.l.b16 %v843
          %v1022 = vunpack.c.h.b16 %v843
          %v1023 = vunpack.c.l.b16 %v844
          %v1024 = vunpack.c.h.b16 %v844
          %v1025 = vunpack.c.l.b16 %v845
          %v1026 = vunpack.c.h.b16 %v845
          %v1027 = vunpack.c.l.b16 %v846
          %v1028 = vunpack.c.h.b16 %v846
          %v1029 = vunpack.c.l.b16 %v847
          %v1030 = vunpack.c.h.b16 %v847
          %v1031 = vunpack.c.l.b16 %v848
          %v1032 = vunpack.c.h.b16 %v848
          %v1033 = vunpack.c.l.b16 %v849
          %v1034 = vunpack.c.h.b16 %v849
          %v1035 = vunpack.c.l.b16 %v850
          %v1036 = vunpack.c.h.b16 %v850
          %v1037 = vunpack.c.l.b16 %v851
          %v1038 = vunpack.c.h.b16 %v851
          %v1039 = vunpack.c.l.b16 %v852
          %v1040 = vunpack.c.h.b16 %v852
          %v1041 = vunpack.c.l.b16 %v853
          %v1042 = vunpack.c.h.b16 %v853
          %v1043 = vunpack.c.l.b16 %v854
          %v1044 = vunpack.c.h.b16 %v854
          %v1045 = vunpack.c.l.b16 %v855
          %v1046 = vunpack.c.h.b16 %v855
          %v1047 = vunpack.c.l.b16 %v856
          %v1048 = vunpack.c.h.b16 %v856
          %v1049 = vunpack.c.l.b16 %v857
          %v1050 = vunpack.c.h.b16 %v857
          %v1051 = vunpack.c.l.b16 %v858
          %v1052 = vunpack.c.h.b16 %v858
          %v1053 = vunpack.c.l.b16 %v859
          %v1054 = vunpack.c.h.b16 %v859
          %v1055 = vunpack.c.l.b16 %v860
          %v1056 = vunpack.c.h.b16 %v860
          %v1057 = vunpack.c.l.b16 %v861
          %v1058 = vunpack.c.h.b16 %v861
          %v1059 = vunpack.c.l.b16 %v862
          %v1060 = vunpack.c.h.b16 %v862
          %v1061 = vunpack.c.l.b16 %v863
          %v1062 = vunpack.c.h.b16 %v863
          %v1063 = vunpack.c.l.b16 %v864
          %v1064 = vunpack.c.h.b16 %v864
          %v1065 = vunpack.c.l.b16 %v865
          %v1066 = vunpack.c.h.b16 %v865
          %v1067 = vunpack.c.l.b16 %v866
          %v1068 = vunpack.c.h.b16 %v866
          %v1069 = vunpack.c.l.b16 %v867
          %v1070 = vunpack.c.h.b16 %v867
          %v1071 = vunpack.c.l.b16 %v868
          %v1072 = vunpack.c.h.b16 %v868
          %v1073 = vunpack.c.l.b16 %v869
          %v1074 = vunpack.c.h.b16 %v869
          %v1075 = vunpack.c.l.b16 %v870
          %v1076 = vunpack.c.h.b16 %v870
          %v1077 = vunpack.c.l.b16 %v871
          %v1078 = vunpack.c.h.b16 %v871
          %v1079 = vunpack.c.l.b16 %v872
          %v1080 = vunpack.c.h.b16 %v872
          %v1081 = vunpack.c.l.b16 %v873
          %v1082 = vunpack.c.h.b16 %v873
          %v1083 = vunpack.c.l.b16 %v874
          %v1084 = vunpack.c.h.b16 %v874
          %v1085 = vunpack.c.l.b16 %v875
          %v1086 = vunpack.c.h.b16 %v875
          %v1087 = vunpack.c.l.b16 %v876
          %v1088 = vunpack.c.h.b16 %v876
          %v1089 = vunpack.c.l.b16 %v877
          %v1090 = vunpack.c.h.b16 %v877
          %v1091 = vunpack.c.l.b16 %v878
          %v1092 = vunpack.c.h.b16 %v878
          %v1093 = vpack.c.b16 %v969, %v965
          %v1094 = vpack.c.b16 %v970, %v966
          %v1095 = vpack.c.b16 %v971, %v967
          %v1096 = vpack.c.b16 %v972, %v968
          %v1097 = vpack.c.b16 %v977, %v973
          %v1098 = vpack.c.b16 %v978, %v974
          %v1099 = vpack.c.b16 %v979, %v975
          %v1100 = vpack.c.b16 %v980, %v976
          %v1101 = vpack.c.b16 %v985, %v981
          %v1102 = vpack.c.b16 %v986, %v982
          %v1103 = vpack.c.b16 %v987, %v983
          %v1104 = vpack.c.b16 %v988, %v984
          %v1105 = vpack.c.b16 %v993, %v989
          %v1106 = vpack.c.b16 %v994, %v990
          %v1107 = vpack.c.b16 %v995, %v991
          %v1108 = vpack.c.b16 %v996, %v992
          %v1109 = vpack.c.b16 %v1001, %v997
          %v1110 = vpack.c.b16 %v1002, %v998
          %v1111 = vpack.c.b16 %v1003, %v999
          %v1112 = vpack.c.b16 %v1004, %v1000
          %v1113 = vpack.c.b16 %v1009, %v1005
          %v1114 = vpack.c.b16 %v1010, %v1006
          %v1115 = vpack.c.b16 %v1011, %v1007
          %v1116 = vpack.c.b16 %v1012, %v1008
          %v1117 = vpack.c.b16 %v1017, %v1013
          %v1118 = vpack.c.b16 %v1018, %v1014
          %v1119 = vpack.c.b16 %v1019, %v1015
          %v1120 = vpack.c.b16 %v1020, %v1016
          %v1121 = vpack.c.b16 %v1025, %v1021
          %v1122 = vpack.c.b16 %v1026, %v1022
          %v1123 = vpack.c.b16 %v1027, %v1023
          %v1124 = vpack.c.b16 %v1028, %v1024
          %v1125 = vpack.c.b16 %v1033, %v1029
          %v1126 = vpack.c.b16 %v1034, %v1030
          %v1127 = vpack.c.b16 %v1035, %v1031
          %v1128 = vpack.c.b16 %v1036, %v1032
          %v1129 = vpack.c.b16 %v1041, %v1037
          %v1130 = vpack.c.b16 %v1042, %v1038
          %v1131 = vpack.c.b16 %v1043, %v1039
          %v1132 = vpack.c.b16 %v1044, %v1040
          %v1133 = vpack.c.b16 %v1049, %v1045
          %v1134 = vpack.c.b16 %v1050, %v1046
          %v1135 = vpack.c.b16 %v1051, %v1047
          %v1136 = vpack.c.b16 %v1052, %v1048
          %v1137 = vpack.c.b16 %v1057, %v1053
          %v1138 = vpack.c.b16 %v1058, %v1054
          %v1139 = vpack.c.b16 %v1059, %v1055
          %v1140 = vpack.c.b16 %v1060, %v1056
          %v1141 = vpack.c.b16 %v1065, %v1061
          %v1142 = vpack.c.b16 %v1066, %v1062
          %v1143 = vpack.c.b16 %v1067, %v1063
          %v1144 = vpack.c.b16 %v1068, %v1064
          %v1145 = vpack.c.b16 %v1073, %v1069
          %v1146 = vpack.c.b16 %v1074, %v1070
          %v1147 = vpack.c.b16 %v1075, %v1071
          %v1148 = vpack.c.b16 %v1076, %v1072
          %v1149 = vpack.c.b16 %v1081, %v1077
          %v1150 = vpack.c.b16 %v1082, %v1078
          %v1151 = vpack.c.b16 %v1083, %v1079
          %v1152 = vpack.c.b16 %v1084, %v1080
          %v1153 = vpack.c.b16 %v1089, %v1085
          %v1154 = vpack.c.b16 %v1090, %v1086
          %v1155 = vpack.c.b16 %v1091, %v1087
          %v1156 = vpack.c.b16 %v1092, %v1088
          %1221 = vmatprep.subr.bf16.mxu0 %v1094
          %1222 = vmatpush1.bf16.msra.mxu0 %v1093
          %1223 = vmatprep.subr.bf16.mxu0 %v1098
          %1224 = vmatpush1.bf16.msra.mxu0 %v1097
          %1225 = vmatprep.subr.bf16.mxu0 %v1102
          %1226 = vmatpush1.bf16.msra.mxu0 %v1101
          %1227 = vmatprep.subr.bf16.mxu0 %v1106
          %1228 = vmatpush1.bf16.msra.mxu0 %v1105
          %1229 = vmatprep.subr.bf16.mxu0 %v1110
          %1230 = vmatpush1.bf16.msra.mxu0 %v1109
          %1231 = vmatprep.subr.bf16.mxu0 %v1114
          %1232 = vmatpush1.bf16.msra.mxu0 %v1113
          %1233 = vmatprep.subr.bf16.mxu0 %v1118
          %1234 = vmatpush1.bf16.msra.mxu0 %v1117
          %1235 = vmatprep.subr.bf16.mxu0 %v1122
          %1236 = vmatpush1.bf16.msra.mxu0 %v1121
          %1237 = vmatprep.subr.bf16.mxu0 %v1126
          %1238 = vmatpush1.bf16.msra.mxu0 %v1125
          %1239 = vmatprep.subr.bf16.mxu0 %v1130
          %1240 = vmatpush1.bf16.msra.mxu0 %v1129
          %1241 = vmatprep.subr.bf16.mxu0 %v1134
          %1242 = vmatpush1.bf16.msra.mxu0 %v1133
          %1243 = vmatprep.subr.bf16.mxu0 %v1138
          %1244 = vmatpush1.bf16.msra.mxu0 %v1137
          %1245 = vmatprep.subr.bf16.mxu0 %v1142
          %1246 = vmatpush1.bf16.msra.mxu0 %v1141
          %1247 = vmatprep.subr.bf16.mxu0 %v1146
          %1248 = vmatpush1.bf16.msra.mxu0 %v1145
          %1249 = vmatprep.subr.bf16.mxu0 %v1150
          %1250 = vmatpush1.bf16.msra.mxu0 %v1149
          %1251 = vmatprep.subr.bf16.mxu0 %v1154
          %1252 = vmatpush1.bf16.msra.mxu0 %v1153
          %1253 = vmatprep.mubr.bf16.mxu0 %v812
          %1254 = vmatmul.mubr.bf16.gmra.mrb[0].mxu0 %v811
          %v1255 = vpop.f32.mrb[0].mxu0
          %v1256 = vadd.f32 %v884, %v1255
          %v1257 = vpop.f32.mrb[0].mxu0
          %v1258 = vadd.f32 %v888, %v1257
          %v1259 = vpop.f32.mrb[0].mxu0
          %v1260 = vadd.f32 %v884, %v1259
          %v1261 = vpop.f32.mrb[0].mxu0
          %v1262 = vadd.f32 %v888, %v1261
          %1263 = vmatprep.mubr.bf16.mxu0 %v814
          %1264 = vmatmul.mubr.bf16.gmra.mrb[0].mxu0 %v813
          %v1265 = vpop.f32.mrb[0].mxu0
          %v1266 = vadd.f32 %v884, %v1265
          %v1267 = vpop.f32.mrb[0].mxu0
          %v1268 = vadd.f32 %v888, %v1267
          %v1269 = vpop.f32.mrb[0].mxu0
          %v1270 = vadd.f32 %v884, %v1269
          %v1271 = vpop.f32.mrb[0].mxu0
          %v1272 = vadd.f32 %v888, %v1271
          %1273 = vdwg.mxu0
          %1274 = vmatprep.subr.bf16.mxu0 %v1096
          %1275 = vmatpush1.bf16.msra.mxu0 %v1095
          %1276 = vmatprep.subr.bf16.mxu0 %v1100
          %1277 = vmatpush1.bf16.msra.mxu0 %v1099
          %1278 = vmatprep.subr.bf16.mxu0 %v1104
          %1279 = vmatpush1.bf16.msra.mxu0 %v1103
          %1280 = vmatprep.subr.bf16.mxu0 %v1108
          %1281 = vmatpush1.bf16.msra.mxu0 %v1107
          %1282 = vmatprep.subr.bf16.mxu0 %v1112
          %1283 = vmatpush1.bf16.msra.mxu0 %v1111
          %1284 = vmatprep.subr.bf16.mxu0 %v1116
          %1285 = vmatpush1.bf16.msra.mxu0 %v1115
          %1286 = vmatprep.subr.bf16.mxu0 %v1120
          %1287 = vmatpush1.bf16.msra.mxu0 %v1119
          %1288 = vmatprep.subr.bf16.mxu0 %v1124
          %1289 = vmatpush1.bf16.msra.mxu0 %v1123
          %1290 = vmatprep.subr.bf16.mxu0 %v1128
          %1291 = vmatpush1.bf16.msra.mxu0 %v1127
          %1292 = vmatprep.subr.bf16.mxu0 %v1132
          %1293 = vmatpush1.bf16.msra.mxu0 %v1131
          %1294 = vmatprep.subr.bf16.mxu0 %v1136
          %1295 = vmatpush1.bf16.msra.mxu0 %v1135
          %1296 = vmatprep.subr.bf16.mxu0 %v1140
          %1297 = vmatpush1.bf16.msra.mxu0 %v1139
          %1298 = vmatprep.subr.bf16.mxu0 %v1144
          %1299 = vmatpush1.bf16.msra.mxu0 %v1143
          %1300 = vmatprep.subr.bf16.mxu0 %v1148
          %1301 = vmatpush1.bf16.msra.mxu0 %v1147
          %1302 = vmatprep.subr.bf16.mxu0 %v1152
          %1303 = vmatpush1.bf16.msra.mxu0 %v1151
          %1304 = vmatprep.subr.bf16.mxu0 %v1156
          %1305 = vmatpush1.bf16.msra.mxu0 %v1155
          %1306 = vmatprep.mubr.bf16.mxu0 %v812
          %1307 = vmatmul.mubr.bf16.gmra.mrb[0].mxu0 %v811
          %v1308 = vpop.f32.mrb[0].mxu0
          %v1309 = vadd.f32 %v892, %v1308
          %v1310 = vpop.f32.mrb[0].mxu0
          %v1311 = vadd.f32 %v896, %v1310
          %v1312 = vpop.f32.mrb[0].mxu0
          %v1313 = vadd.f32 %v892, %v1312
          %v1314 = vpop.f32.mrb[0].mxu0
          %v1315 = vadd.f32 %v896, %v1314
          %1316 = vmatprep.mubr.bf16.mxu0 %v814
          %1317 = vmatmul.mubr.bf16.gmra.mrb[0].mxu0 %v813
          %v1318 = vpop.f32.mrb[0].mxu0
          %v1319 = vadd.f32 %v892, %v1318
          %v1320 = vpop.f32.mrb[0].mxu0
          %v1321 = vadd.f32 %v896, %v1320
          %v1322 = vpop.f32.mrb[0].mxu0
          %v1323 = vadd.f32 %v892, %v1322
          %v1324 = vpop.f32.mrb[0].mxu0
          %v1325 = vadd.f32 %v896, %v1324
          %1326 = vdwg.mxu0
          %v1327 = vmax.f32 %v1256, 0.0
          %v1328 = vmax.f32 %v1258, 0.0
          %v1329 = vmax.f32 %v1309, 0.0
          %v1330 = vmax.f32 %v1311, 0.0
          %v1331 = vmax.f32 %v1260, 0.0
          %v1332 = vmax.f32 %v1262, 0.0
          %v1333 = vmax.f32 %v1313, 0.0
          %v1334 = vmax.f32 %v1315, 0.0
          %v1335 = vmax.f32 %v1266, 0.0
          %v1336 = vmax.f32 %v1268, 0.0
          %v1337 = vmax.f32 %v1319, 0.0
          %v1338 = vmax.f32 %v1321, 0.0
          %v1339 = vmax.f32 %v1270, 0.0
          %v1340 = vmax.f32 %v1272, 0.0
          %v1341 = vmax.f32 %v1323, 0.0
          %v1342 = vmax.f32 %v1325, 0.0
          %v1343 = vld [vmem:[%s683] sm:$0xff]
          %v1344 = vld [vmem:[%s683 + $0x8] sm:$0xff]
          %v1345 = vld [vmem:[%s683 + $0x10] sm:$0xff]
          %v1346 = vld [vmem:[%s683 + $0x18] sm:$0xff]
          %v1347 = vld [vmem:[%s4] sm:$0x1]
          %v1348 = vld [vmem:[%s5] sm:$0x1]
          %vm1349 = vcmask 64512
          %v1350 = vsel %vm1349, %v1343, 0.0
          %1351 = vadd.xlane.f32.xlu0 %v1350
          %v1352 = vpop.xlane.xlu0 %1351
          %v1353 = vsel %vm1349, %v1344, 0.0
          %1354 = vadd.xlane.f32.xlu0 %v1353
          %v1355 = vpop.xlane.xlu0 %1354
          %v1356 = vsel %vm1349, %v1345, 0.0
          %1357 = vadd.xlane.f32.xlu0 %v1356
          %v1358 = vpop.xlane.xlu0 %1357
          %v1359 = vsel %vm1349, %v1346, 0.0
          %1360 = vadd.xlane.f32.xlu0 %v1359
          %v1361 = vpop.xlane.xlu0 %1360
          %v1362 = vrcp.pop 8.0
          %v1363 = vmul.f32 %v1352, %v1362
          %v1364 = vmul.f32 %v1355, %v1362
          %v1365 = vmul.f32 %v1358, %v1362
          %v1366 = vmul.f32 %v1361, %v1362
          %v1367 = vsub.f32 %v1343, %v1363
          %v1368 = vsub.f32 %v1344, %v1364
          %v1369 = vsub.f32 %v1345, %v1365
          %v1370 = vsub.f32 %v1346, %v1366
          %v1371 = vmul.f32 %v1367, %v1367
          %v1372 = vmul.f32 %v1368, %v1368
          %v1373 = vmul.f32 %v1369, %v1369
          %v1374 = vmul.f32 %v1370, %v1370
          %v1375 = vsel %vm1349, %v1371, 0.0
          %1376 = vadd.xlane.f32.xlu0 %v1375
          %v1377 = vpop.xlane.xlu0 %1376
          %v1378 = vsel %vm1349, %v1372, 0.0
          %1379 = vadd.xlane.f32.xlu0 %v1378
          %v1380 = vpop.xlane.xlu0 %1379
          %v1381 = vsel %vm1349, %v1373, 0.0
          %1382 = vadd.xlane.f32.xlu0 %v1381
          %v1383 = vpop.xlane.xlu0 %1382
          %v1384 = vsel %vm1349, %v1374, 0.0
          %1385 = vadd.xlane.f32.xlu0 %v1384
          %v1386 = vpop.xlane.xlu0 %1385
          %v1387 = vmul.f32 %v1377, %v1362
          %v1388 = vmul.f32 %v1380, %v1362
          %v1389 = vmul.f32 %v1383, %v1362
          %v1390 = vmul.f32 %v1386, %v1362
          %v1391 = vadd.f32 %v1387, 1e-05
          %v1392 = vadd.f32 %v1388, 1e-05
          %v1393 = vadd.f32 %v1389, 1e-05
          %v1394 = vadd.f32 %v1390, 1e-05
          %v1395 = vrsqrt.pop %v1391
          %v1396 = vrsqrt.pop %v1392
          %v1397 = vrsqrt.pop %v1393
          %v1398 = vrsqrt.pop %v1394
          %v1399 = vmul.f32 %v1367, %v1395
          %v1400 = vmul.f32 %v1368, %v1396
          %v1401 = vmul.f32 %v1369, %v1397
          %v1402 = vmul.f32 %v1370, %v1398
          %v1404 = vlaneseq
          %v1405 = vshrl.u32 %v1404, 7
          %v1406 = vsub.s32 0, %v1405
          %v1407 = vrot.slane %v1347, %v1406
          %v1409 = vmul.f32 %v1399, %v1407
          %v1410 = vmul.f32 %v1400, %v1407
          %v1411 = vmul.f32 %v1401, %v1407
          %v1412 = vmul.f32 %v1402, %v1407
          %v1414 = vlaneseq
          %v1415 = vshrl.u32 %v1414, 7
          %v1416 = vsub.s32 0, %v1415
          %v1417 = vrot.slane %v1348, %v1416
          %v1419 = vadd.f32 %v1409, %v1417
          %v1420 = vadd.f32 %v1410, %v1417
          %v1421 = vadd.f32 %v1411, %v1417
          %v1422 = vadd.f32 %v1412, %v1417
          %v1423 = vpack.c.bf16 %v1420, %v1419
          %v1424 = vpack.c.bf16 %v1422, %v1421
          %v1425 = vld [vmem:[%s8] sm:$0xf]
          %v1426 = vld [vmem:[%s9] sm:$0x1]
          %v1428 = vlaneseq
          %v1429 = vshrl.u32 %v1428, 7
          %v1430 = vsub.s32 0, %v1429
          %v1431 = vrot.slane %v1426, %v1430
          %v1434 = vsel %vm1349, %v1423, 0
          %v1437 = vsel %vm1349, %v1424, 0
          %vm1439 = vcmask 1043456
          %v1441 = vsel %vm1439, %v1425, 0
          %1443 = vmatprep.subr.bf16.mxu0 0
          %1444 = vmatpush1.bf16.msra.mxu0 %v1441
          %1445 = vmatprep.subr.bf16.mxu0 0
          %1446 = vmatpush1.bf16.msra.mxu0 0
          %1447 = vmatprep.subr.bf16.mxu0 0
          %1448 = vmatpush1.bf16.msra.mxu0 0
          %1449 = vmatprep.subr.bf16.mxu0 0
          %1450 = vmatpush1.bf16.msra.mxu0 0
          %1451 = vmatprep.subr.bf16.mxu0 0
          %1452 = vmatpush1.bf16.msra.mxu0 0
          %1453 = vmatprep.subr.bf16.mxu0 0
          %1454 = vmatpush1.bf16.msra.mxu0 0
          %1455 = vmatprep.subr.bf16.mxu0 0
          %1456 = vmatpush1.bf16.msra.mxu0 0
          %1457 = vmatprep.subr.bf16.mxu0 0
          %1458 = vmatpush1.bf16.msra.mxu0 0
          %1459 = vmatprep.subr.bf16.mxu0 0
          %1460 = vmatpush1.bf16.msra.mxu0 0
          %1461 = vmatprep.subr.bf16.mxu0 0
          %1462 = vmatpush1.bf16.msra.mxu0 0
          %1463 = vmatprep.subr.bf16.mxu0 0
          %1464 = vmatpush1.bf16.msra.mxu0 0
          %1465 = vmatprep.subr.bf16.mxu0 0
          %1466 = vmatpush1.bf16.msra.mxu0 0
          %1467 = vmatprep.subr.bf16.mxu0 0
          %1468 = vmatpush1.bf16.msra.mxu0 0
          %1469 = vmatprep.subr.bf16.mxu0 0
          %1470 = vmatpush1.bf16.msra.mxu0 0
          %1471 = vmatprep.subr.bf16.mxu0 0
          %1472 = vmatpush1.bf16.msra.mxu0 0
          %1473 = vmatprep.subr.bf16.mxu0 0
          %1474 = vmatpush1.bf16.msra.mxu0 0
          %1475 = vmatprep.mubr.bf16.mxu0 0
          %1476 = vmatmul.mubr.bf16.gmra.mrb[0].mxu0 %v1434
          %v1477 = vpop.f32.mrb[0].mxu0
          %v1478 = vadd.f32 %v1431, %v1477
          %v1479 = vpop.f32.mrb[0].mxu0
          %v1480 = vpop.f32.mrb[0].mxu0
          %v1481 = vadd.f32 %v1431, %v1480
          %v1482 = vpop.f32.mrb[0].mxu0
          %1483 = vmatprep.mubr.bf16.mxu0 0
          %1484 = vmatmul.mubr.bf16.gmra.mrb[0].mxu0 %v1437
          %v1485 = vpop.f32.mrb[0].mxu0
          %v1486 = vadd.f32 %v1431, %v1485
          %v1487 = vpop.f32.mrb[0].mxu0
          %v1488 = vpop.f32.mrb[0].mxu0
          %v1489 = vadd.f32 %v1431, %v1488
          %v1490 = vpop.f32.mrb[0].mxu0
          %1491 = vdwg.mxu0
          %v1492 = vmax.f32 %v1478, 0.0
          %v1493 = vmax.f32 %v1481, 0.0
          %v1494 = vmax.f32 %v1486, 0.0
          %v1495 = vmax.f32 %v1489, 0.0
          %v1496 = vpack.c.bf16 %v1331, %v1327
          %v1497 = vpack.c.bf16 %v1332, %v1328
          %v1498 = vpack.c.bf16 %v1333, %v1329
          %v1499 = vpack.c.bf16 %v1334, %v1330
          %v1500 = vpack.c.bf16 %v1339, %v1335
          %v1501 = vpack.c.bf16 %v1340, %v1336
          %v1502 = vpack.c.bf16 %v1341, %v1337
          %v1503 = vpack.c.bf16 %v1342, %v1338
          %v1504 = vld [vmem:[#allocation8] sm:$0xf]
          %v1505 = vld [vmem:[#allocation8 + $0x4] sm:$0xf]
          %v1506 = vld [vmem:[#allocation8 + $0x8] sm:$0xf]
          %v1507 = vld [vmem:[#allocation8 + $0xc] sm:$0xf]
          %v1508 = vld [vmem:[#allocation8 + $0x10] sm:$0xf]
          %v1509 = vld [vmem:[#allocation8 + $0x14] sm:$0xf]
          %v1510 = vld [vmem:[#allocation8 + $0x18] sm:$0xf]
          %v1511 = vld [vmem:[#allocation8 + $0x1c] sm:$0xf]
          %v1512 = vld [vmem:[#allocation8 + $0x20] sm:$0xf]
          %v1513 = vld [vmem:[#allocation8 + $0x24] sm:$0xf]
          %v1514 = vld [vmem:[#allocation8 + $0x28] sm:$0xf]
          %v1515 = vld [vmem:[#allocation8 + $0x2c] sm:$0xf]
          %v1516 = vld [vmem:[#allocation8 + $0x30] sm:$0xf]
          %v1517 = vld [vmem:[#allocation8 + $0x34] sm:$0xf]
          %v1518 = vld [vmem:[#allocation8 + $0x38] sm:$0xf]
          %v1519 = vld [vmem:[#allocation8 + $0x3c] sm:$0xf]
          %v1520 = vld [vmem:[#allocation8 + $0x40] sm:$0xf]
          %v1521 = vld [vmem:[#allocation8 + $0x44] sm:$0xf]
          %v1522 = vld [vmem:[#allocation8 + $0x48] sm:$0xf]
          %v1523 = vld [vmem:[#allocation8 + $0x4c] sm:$0xf]
          %v1524 = vld [vmem:[#allocation8 + $0x50] sm:$0xf]
          %v1525 = vld [vmem:[#allocation8 + $0x54] sm:$0xf]
          %v1526 = vld [vmem:[#allocation8 + $0x58] sm:$0xf]
          %v1527 = vld [vmem:[#allocation8 + $0x5c] sm:$0xf]
          %v1528 = vld [vmem:[#allocation8 + $0x60] sm:$0xf]
          %v1529 = vld [vmem:[#allocation8 + $0x64] sm:$0xf]
          %v1530 = vld [vmem:[#allocation8 + $0x68] sm:$0xf]
          %v1531 = vld [vmem:[#allocation8 + $0x6c] sm:$0xf]
          %v1532 = vld [vmem:[#allocation8 + $0x70] sm:$0xf]
          %v1533 = vld [vmem:[#allocation8 + $0x74] sm:$0xf]
          %v1534 = vld [vmem:[#allocation8 + $0x78] sm:$0xf]
          %v1535 = vld [vmem:[#allocation8 + $0x7c] sm:$0xf]
          %v1536 = vld [vmem:[#allocation8 + $0x80] sm:$0xf]
          %v1537 = vld [vmem:[#allocation8 + $0x84] sm:$0xf]
          %v1538 = vld [vmem:[#allocation8 + $0x88] sm:$0xf]
          %v1539 = vld [vmem:[#allocation8 + $0x8c] sm:$0xf]
          %v1540 = vld [vmem:[#allocation8 + $0x90] sm:$0xf]
          %v1541 = vld [vmem:[#allocation8 + $0x94] sm:$0xf]
          %v1542 = vld [vmem:[#allocation8 + $0x98] sm:$0xf]
          %v1543 = vld [vmem:[#allocation8 + $0x9c] sm:$0xf]
          %v1544 = vld [vmem:[#allocation8 + $0xa0] sm:$0xf]
          %v1545 = vld [vmem:[#allocation8 + $0xa4] sm:$0xf]
          %v1546 = vld [vmem:[#allocation8 + $0xa8] sm:$0xf]
          %v1547 = vld [vmem:[#allocation8 + $0xac] sm:$0xf]
          %v1548 = vld [vmem:[#allocation8 + $0xb0] sm:$0xf]
          %v1549 = vld [vmem:[#allocation8 + $0xb4] sm:$0xf]
          %v1550 = vld [vmem:[#allocation8 + $0xb8] sm:$0xf]
          %v1551 = vld [vmem:[#allocation8 + $0xbc] sm:$0xf]
          %v1552 = vld [vmem:[#allocation8 + $0xc0] sm:$0xf]
          %v1553 = vld [vmem:[#allocation8 + $0xc4] sm:$0xf]
          %v1554 = vld [vmem:[#allocation8 + $0xc8] sm:$0xf]
          %v1555 = vld [vmem:[#allocation8 + $0xcc] sm:$0xf]
          %v1556 = vld [vmem:[#allocation8 + $0xd0] sm:$0xf]
          %v1557 = vld [vmem:[#allocation8 + $0xd4] sm:$0xf]
          %v1558 = vld [vmem:[#allocation8 + $0xd8] sm:$0xf]
          %v1559 = vld [vmem:[#allocation8 + $0xdc] sm:$0xf]
          %v1560 = vld [vmem:[#allocation8 + $0xe0] sm:$0xf]
          %v1561 = vld [vmem:[#allocation8 + $0xe4] sm:$0xf]
          %v1562 = vld [vmem:[#allocation8 + $0xe8] sm:$0xf]
          %v1563 = vld [vmem:[#allocation8 + $0xec] sm:$0xf]
          %v1564 = vld [vmem:[#allocation8 + $0xf0] sm:$0xf]
          %v1565 = vld [vmem:[#allocation8 + $0xf4] sm:$0xf]
          %v1566 = vld [vmem:[#allocation8 + $0xf8] sm:$0xf]
          %v1567 = vld [vmem:[#allocation8 + $0xfc] sm:$0xf]
          %v1568 = vpack.c.bf16 %v1493, %v1492
          %v1569 = vpack.c.bf16 %v1495, %v1494
          %v1570 = vld [vmem:[%s11] sm:$0xf]
          %v1571 = vld [vmem:[%s11 + $0x4] sm:$0xf]
          %v1572 = vld [vmem:[%s11 + $0x8] sm:$0xf]
          %v1573 = vld [vmem:[%s11 + $0xc] sm:$0xf]
          %v1574 = vld [vmem:[%s11 + $0x10] sm:$0xf]
          %v1575 = vld [vmem:[%s11 + $0x14] sm:$0xf]
          %v1576 = vld [vmem:[%s11 + $0x18] sm:$0xf]
          %v1577 = vld [vmem:[%s11 + $0x1c] sm:$0xf]
          %v1578 = vld [vmem:[%s11 + $0x20] sm:$0xf]
          %v1579 = vld [vmem:[%s11 + $0x24] sm:$0xf]
          %v1580 = vld [vmem:[%s11 + $0x28] sm:$0xf]
          %v1581 = vld [vmem:[%s11 + $0x2c] sm:$0xf]
          %v1582 = vld [vmem:[%s11 + $0x30] sm:$0xf]
          %v1583 = vld [vmem:[%s11 + $0x34] sm:$0xf]
          %v1584 = vld [vmem:[%s11 + $0x38] sm:$0xf]
          %v1585 = vld [vmem:[%s11 + $0x3c] sm:$0xf]
          %v1602 = vunpack.c.l.b16 %v1570
          %v1603 = vunpack.c.l.b16 %v1571
          %v1604 = vunpack.c.l.b16 %v1572
          %v1605 = vunpack.c.l.b16 %v1573
          %v1606 = vunpack.c.l.b16 %v1574
          %v1607 = vunpack.c.l.b16 %v1575
          %v1608 = vunpack.c.l.b16 %v1576
          %v1609 = vunpack.c.l.b16 %v1577
          %v1610 = vunpack.c.l.b16 %v1578
          %v1611 = vunpack.c.l.b16 %v1579
          %v1612 = vunpack.c.l.b16 %v1580
          %v1613 = vunpack.c.l.b16 %v1581
          %v1614 = vunpack.c.l.b16 %v1582
          %v1615 = vunpack.c.l.b16 %v1583
          %v1616 = vunpack.c.l.b16 %v1584
          %v1617 = vunpack.c.l.b16 %v1585
          %v1618 = vpack.c.b16 %v1603, %v1602
          %v1619 = vpack.c.b16 %v1605, %v1604
          %v1620 = vpack.c.b16 %v1607, %v1606
          %v1621 = vpack.c.b16 %v1609, %v1608
          %v1622 = vpack.c.b16 %v1611, %v1610
          %v1623 = vpack.c.b16 %v1613, %v1612
          %v1624 = vpack.c.b16 %v1615, %v1614
          %v1625 = vpack.c.b16 %v1617, %v1616
          %1634 = vmatprep.subr.bf16.mxu0 0
          %1635 = vmatpush1.bf16.msra.mxu0 %v1618
          %1636 = vmatprep.subr.bf16.mxu0 0
          %1637 = vmatpush1.bf16.msra.mxu0 %v1619
          %1638 = vmatprep.subr.bf16.mxu0 0
          %1639 = vmatpush1.bf16.msra.mxu0 %v1620
          %1640 = vmatprep.subr.bf16.mxu0 0
          %1641 = vmatpush1.bf16.msra.mxu0 %v1621
          %1642 = vmatprep.subr.bf16.mxu0 0
          %1643 = vmatpush1.bf16.msra.mxu0 %v1622
          %1644 = vmatprep.subr.bf16.mxu0 0
          %1645 = vmatpush1.bf16.msra.mxu0 %v1623
          %1646 = vmatprep.subr.bf16.mxu0 0
          %1647 = vmatpush1.bf16.msra.mxu0 %v1624
          %1648 = vmatprep.subr.bf16.mxu0 0
          %1649 = vmatpush1.bf16.msra.mxu0 %v1625
          %1650 = vmatprep.subr.bf16.mxu0 0
          %1651 = vmatpush1.bf16.msra.mxu0 0
          %1652 = vmatprep.subr.bf16.mxu0 0
          %1653 = vmatpush1.bf16.msra.mxu0 0
          %1654 = vmatprep.subr.bf16.mxu0 0
          %1655 = vmatpush1.bf16.msra.mxu0 0
          %1656 = vmatprep.subr.bf16.mxu0 0
          %1657 = vmatpush1.bf16.msra.mxu0 0
          %1658 = vmatprep.subr.bf16.mxu0 0
          %1659 = vmatpush1.bf16.msra.mxu0 0
          %1660 = vmatprep.subr.bf16.mxu0 0
          %1661 = vmatpush1.bf16.msra.mxu0 0
          %1662 = vmatprep.subr.bf16.mxu0 0
          %1663 = vmatpush1.bf16.msra.mxu0 0
          %1664 = vmatprep.subr.bf16.mxu0 0
          %1665 = vmatpush1.bf16.msra.mxu0 0
          %1666 = vmatprep.mubr.bf16.mxu0 0
          %1667 = vmatmul.mubr.bf16.gmra.mrb[0].mxu0 %v1568
          %v1668 = vpop.f32.mrb[0].mxu0
          %v1669 = vadd.f32 0.0, %v1668
          %v1670 = vpop.f32.mrb[0].mxu0
          %v1671 = vpop.f32.mrb[0].mxu0
          %v1672 = vadd.f32 0.0, %v1671
          %v1673 = vpop.f32.mrb[0].mxu0
          %1674 = vmatprep.mubr.bf16.mxu0 0
          %1675 = vmatmul.mubr.bf16.gmra.mrb[0].mxu0 %v1569
          %v1676 = vpop.f32.mrb[0].mxu0
          %v1677 = vadd.f32 0.0, %v1676
          %v1678 = vpop.f32.mrb[0].mxu0
          %v1679 = vpop.f32.mrb[0].mxu0
          %v1680 = vadd.f32 0.0, %v1679
          %v1681 = vpop.f32.mrb[0].mxu0
          %1682 = vdwg.mxu0
          %v1747 = vunpack.c.l.b16 %v1504
          %v1748 = vunpack.c.l.b16 %v1505
          %v1749 = vunpack.c.l.b16 %v1506
          %v1750 = vunpack.c.l.b16 %v1507
          %v1751 = vunpack.c.l.b16 %v1508
          %v1752 = vunpack.c.l.b16 %v1509
          %v1753 = vunpack.c.l.b16 %v1510
          %v1754 = vunpack.c.l.b16 %v1511
          %v1755 = vunpack.c.l.b16 %v1512
          %v1756 = vunpack.c.l.b16 %v1513
          %v1757 = vunpack.c.l.b16 %v1514
          %v1758 = vunpack.c.l.b16 %v1515
          %v1759 = vunpack.c.l.b16 %v1516
          %v1760 = vunpack.c.l.b16 %v1517
          %v1761 = vunpack.c.l.b16 %v1518
          %v1762 = vunpack.c.l.b16 %v1519
          %v1763 = vunpack.c.l.b16 %v1520
          %v1764 = vunpack.c.l.b16 %v1521
          %v1765 = vunpack.c.l.b16 %v1522
          %v1766 = vunpack.c.l.b16 %v1523
          %v1767 = vunpack.c.l.b16 %v1524
          %v1768 = vunpack.c.l.b16 %v1525
          %v1769 = vunpack.c.l.b16 %v1526
          %v1770 = vunpack.c.l.b16 %v1527
          %v1771 = vunpack.c.l.b16 %v1528
          %v1772 = vunpack.c.l.b16 %v1529
          %v1773 = vunpack.c.l.b16 %v1530
          %v1774 = vunpack.c.l.b16 %v1531
          %v1775 = vunpack.c.l.b16 %v1532
          %v1776 = vunpack.c.l.b16 %v1533
          %v1777 = vunpack.c.l.b16 %v1534
          %v1778 = vunpack.c.l.b16 %v1535
          %v1779 = vunpack.c.l.b16 %v1536
          %v1780 = vunpack.c.l.b16 %v1537
          %v1781 = vunpack.c.l.b16 %v1538
          %v1782 = vunpack.c.l.b16 %v1539
          %v1783 = vunpack.c.l.b16 %v1540
          %v1784 = vunpack.c.l.b16 %v1541
          %v1785 = vunpack.c.l.b16 %v1542
          %v1786 = vunpack.c.l.b16 %v1543
          %v1787 = vunpack.c.l.b16 %v1544
          %v1788 = vunpack.c.l.b16 %v1545
          %v1789 = vunpack.c.l.b16 %v1546
          %v1790 = vunpack.c.l.b16 %v1547
          %v1791 = vunpack.c.l.b16 %v1548
          %v1792 = vunpack.c.l.b16 %v1549
          %v1793 = vunpack.c.l.b16 %v1550
          %v1794 = vunpack.c.l.b16 %v1551
          %v1795 = vunpack.c.l.b16 %v1552
          %v1796 = vunpack.c.l.b16 %v1553
          %v1797 = vunpack.c.l.b16 %v1554
          %v1798 = vunpack.c.l.b16 %v1555
          %v1799 = vunpack.c.l.b16 %v1556
          %v1800 = vunpack.c.l.b16 %v1557
          %v1801 = vunpack.c.l.b16 %v1558
          %v1802 = vunpack.c.l.b16 %v1559
          %v1803 = vunpack.c.l.b16 %v1560
          %v1804 = vunpack.c.l.b16 %v1561
          %v1805 = vunpack.c.l.b16 %v1562
          %v1806 = vunpack.c.l.b16 %v1563
          %v1807 = vunpack.c.l.b16 %v1564
          %v1808 = vunpack.c.l.b16 %v1565
          %v1809 = vunpack.c.l.b16 %v1566
          %v1810 = vunpack.c.l.b16 %v1567
          %v1811 = vpack.c.b16 %v1748, %v1747
          %v1812 = vpack.c.b16 %v1750, %v1749
          %v1813 = vpack.c.b16 %v1752, %v1751
          %v1814 = vpack.c.b16 %v1754, %v1753
          %v1815 = vpack.c.b16 %v1756, %v1755
          %v1816 = vpack.c.b16 %v1758, %v1757
          %v1817 = vpack.c.b16 %v1760, %v1759
          %v1818 = vpack.c.b16 %v1762, %v1761
          %v1819 = vpack.c.b16 %v1764, %v1763
          %v1820 = vpack.c.b16 %v1766, %v1765
          %v1821 = vpack.c.b16 %v1768, %v1767
          %v1822 = vpack.c.b16 %v1770, %v1769
          %v1823 = vpack.c.b16 %v1772, %v1771
          %v1824 = vpack.c.b16 %v1774, %v1773
          %v1825 = vpack.c.b16 %v1776, %v1775
          %v1826 = vpack.c.b16 %v1778, %v1777
          %v1827 = vpack.c.b16 %v1780, %v1779
          %v1828 = vpack.c.b16 %v1782, %v1781
          %v1829 = vpack.c.b16 %v1784, %v1783
          %v1830 = vpack.c.b16 %v1786, %v1785
          %v1831 = vpack.c.b16 %v1788, %v1787
          %v1832 = vpack.c.b16 %v1790, %v1789
          %v1833 = vpack.c.b16 %v1792, %v1791
          %v1834 = vpack.c.b16 %v1794, %v1793
          %v1835 = vpack.c.b16 %v1796, %v1795
          %v1836 = vpack.c.b16 %v1798, %v1797
          %v1837 = vpack.c.b16 %v1800, %v1799
          %v1838 = vpack.c.b16 %v1802, %v1801
          %v1839 = vpack.c.b16 %v1804, %v1803
          %v1840 = vpack.c.b16 %v1806, %v1805
          %v1841 = vpack.c.b16 %v1808, %v1807
          %v1842 = vpack.c.b16 %v1810, %v1809
          %1875 = vmatprep.subr.bf16.mxu0 0
          %1876 = vmatpush1.bf16.msra.mxu0 %v1811
          %1877 = vmatprep.subr.bf16.mxu0 0
          %1878 = vmatpush1.bf16.msra.mxu0 %v1812
          %1879 = vmatprep.subr.bf16.mxu0 0
          %1880 = vmatpush1.bf16.msra.mxu0 %v1813
          %1881 = vmatprep.subr.bf16.mxu0 0
          %1882 = vmatpush1.bf16.msra.mxu0 %v1814
          %1883 = vmatprep.subr.bf16.mxu0 0
          %1884 = vmatpush1.bf16.msra.mxu0 %v1815
          %1885 = vmatprep.subr.bf16.mxu0 0
          %1886 = vmatpush1.bf16.msra.mxu0 %v1816
          %1887 = vmatprep.subr.bf16.mxu0 0
          %1888 = vmatpush1.bf16.msra.mxu0 %v1817
          %1889 = vmatprep.subr.bf16.mxu0 0
          %1890 = vmatpush1.bf16.msra.mxu0 %v1818
          %1891 = vmatprep.subr.bf16.mxu0 0
          %1892 = vmatpush1.bf16.msra.mxu0 %v1819
          %1893 = vmatprep.subr.bf16.mxu0 0
          %1894 = vmatpush1.bf16.msra.mxu0 %v1820
          %1895 = vmatprep.subr.bf16.mxu0 0
          %1896 = vmatpush1.bf16.msra.mxu0 %v1821
          %1897 = vmatprep.subr.bf16.mxu0 0
          %1898 = vmatpush1.bf16.msra.mxu0 %v1822
          %1899 = vmatprep.subr.bf16.mxu0 0
          %1900 = vmatpush1.bf16.msra.mxu0 %v1823
          %1901 = vmatprep.subr.bf16.mxu0 0
          %1902 = vmatpush1.bf16.msra.mxu0 %v1824
          %1903 = vmatprep.subr.bf16.mxu0 0
          %1904 = vmatpush1.bf16.msra.mxu0 %v1825
          %1905 = vmatprep.subr.bf16.mxu0 0
          %1906 = vmatpush1.bf16.msra.mxu0 %v1826
          %1907 = vmatprep.mubr.bf16.mxu0 %v1497
          %1908 = vmatmul.mubr.bf16.gmra.mrb[0].mxu0 %v1496
          %v1909 = vpop.f32.mrb[0].mxu0
          %v1910 = vadd.f32 %v1669, %v1909
          %v1911 = vpop.f32.mrb[0].mxu0
          %v1912 = vpop.f32.mrb[0].mxu0
          %v1913 = vadd.f32 %v1672, %v1912
          %v1914 = vpop.f32.mrb[0].mxu0
          %1915 = vmatprep.mubr.bf16.mxu0 %v1501
          %1916 = vmatmul.mubr.bf16.gmra.mrb[0].mxu0 %v1500
          %v1917 = vpop.f32.mrb[0].mxu0
          %v1918 = vadd.f32 %v1677, %v1917
          %v1919 = vpop.f32.mrb[0].mxu0
          %v1920 = vpop.f32.mrb[0].mxu0
          %v1921 = vadd.f32 %v1680, %v1920
          %v1922 = vpop.f32.mrb[0].mxu0
          %1923 = vdwg.mxu0
          %1924 = vmatprep.subr.bf16.mxu0 0
          %1925 = vmatpush1.bf16.msra.mxu0 %v1827
          %1926 = vmatprep.subr.bf16.mxu0 0
          %1927 = vmatpush1.bf16.msra.mxu0 %v1828
          %1928 = vmatprep.subr.bf16.mxu0 0
          %1929 = vmatpush1.bf16.msra.mxu0 %v1829
          %1930 = vmatprep.subr.bf16.mxu0 0
          %1931 = vmatpush1.bf16.msra.mxu0 %v1830
          %1932 = vmatprep.subr.bf16.mxu0 0
          %1933 = vmatpush1.bf16.msra.mxu0 %v1831
          %1934 = vmatprep.subr.bf16.mxu0 0
          %1935 = vmatpush1.bf16.msra.mxu0 %v1832
          %1936 = vmatprep.subr.bf16.mxu0 0
          %1937 = vmatpush1.bf16.msra.mxu0 %v1833
          %1938 = vmatprep.subr.bf16.mxu0 0
          %1939 = vmatpush1.bf16.msra.mxu0 %v1834
          %1940 = vmatprep.subr.bf16.mxu0 0
          %1941 = vmatpush1.bf16.msra.mxu0 %v1835
          %1942 = vmatprep.subr.bf16.mxu0 0
          %1943 = vmatpush1.bf16.msra.mxu0 %v1836
          %1944 = vmatprep.subr.bf16.mxu0 0
          %1945 = vmatpush1.bf16.msra.mxu0 %v1837
          %1946 = vmatprep.subr.bf16.mxu0 0
          %1947 = vmatpush1.bf16.msra.mxu0 %v1838
          %1948 = vmatprep.subr.bf16.mxu0 0
          %1949 = vmatpush1.bf16.msra.mxu0 %v1839
          %1950 = vmatprep.subr.bf16.mxu0 0
          %1951 = vmatpush1.bf16.msra.mxu0 %v1840
          %1952 = vmatprep.subr.bf16.mxu0 0
          %1953 = vmatpush1.bf16.msra.mxu0 %v1841
          %1954 = vmatprep.subr.bf16.mxu0 0
          %1955 = vmatpush1.bf16.msra.mxu0 %v1842
          %1956 = vmatprep.mubr.bf16.mxu0 %v1499
          %1957 = vmatmul.mubr.bf16.gmra.mrb[0].mxu0 %v1498
          %v1958 = vpop.f32.mrb[0].mxu0
          %v1959 = vadd.f32 %v1910, %v1958
          %v1960 = vpop.f32.mrb[0].mxu0
          %v1961 = vpop.f32.mrb[0].mxu0
          %v1962 = vadd.f32 %v1913, %v1961
          %v1963 = vpop.f32.mrb[0].mxu0
          %1964 = vmatprep.mubr.bf16.mxu0 %v1503
          %1965 = vmatmul.mubr.bf16.gmra.mrb[0].mxu0 %v1502
          %v1966 = vpop.f32.mrb[0].mxu0
          %v1967 = vadd.f32 %v1918, %v1966
          %v1968 = vpop.f32.mrb[0].mxu0
          %v1969 = vpop.f32.mrb[0].mxu0
          %v1970 = vadd.f32 %v1921, %v1969
          %v1971 = vpop.f32.mrb[0].mxu0
          %1972 = vdwg.mxu0
          %v1973 = vld [vmem:[%s12] sm:$0x1]
          %v1975 = vlaneseq
          %v1976 = vshrl.u32 %v1975, 7
          %v1977 = vsub.s32 0, %v1976
          %v1978 = vrot.slane %v1973, %v1977
          %v1980 = vadd.f32 %v1959, %v1978
          %v1981 = vadd.f32 %v1962, %v1978
          %v1982 = vadd.f32 %v1967, %v1978
          %v1983 = vadd.f32 %v1970, %v1978
          %v1984 = vmax.f32 %v1980, 0.0
          %v1985 = vmax.f32 %v1981, 0.0
          %v1986 = vmax.f32 %v1982, 0.0
          %v1987 = vmax.f32 %v1983, 0.0
          %v1988 = vpack.c.bf16 %v1985, %v1984
          %v1989 = vpack.c.bf16 %v1987, %v1986
          %v1990 = vld [vmem:[#allocation9] sm:$0xf]
          %v1991 = vld [vmem:[#allocation9 + $0x4] sm:$0xf]
          %v1992 = vld [vmem:[#allocation9 + $0x8] sm:$0xf]
          %v1993 = vld [vmem:[#allocation9 + $0xc] sm:$0xf]
          %v1994 = vld [vmem:[#allocation9 + $0x10] sm:$0xf]
          %v1995 = vld [vmem:[#allocation9 + $0x14] sm:$0xf]
          %v1996 = vld [vmem:[#allocation9 + $0x18] sm:$0xf]
          %v1997 = vld [vmem:[#allocation9 + $0x1c] sm:$0xf]
          %v1998 = vld [vmem:[#allocation9 + $0x20] sm:$0xf]
          %v1999 = vld [vmem:[#allocation9 + $0x24] sm:$0xf]
          %v2000 = vld [vmem:[#allocation9 + $0x28] sm:$0xf]
          %v2001 = vld [vmem:[#allocation9 + $0x2c] sm:$0xf]
          %v2002 = vld [vmem:[#allocation9 + $0x30] sm:$0xf]
          %v2003 = vld [vmem:[#allocation9 + $0x34] sm:$0xf]
          %v2004 = vld [vmem:[#allocation9 + $0x38] sm:$0xf]
          %v2005 = vld [vmem:[#allocation9 + $0x3c] sm:$0xf]
          %v2006 = vld [vmem:[%s14] sm:$0x1]
          %v2008 = vlaneseq
          %v2009 = vshrl.u32 %v2008, 7
          %v2010 = vsub.s32 0, %v2009
          %v2011 = vrot.slane %v2006, %v2010
          %v2029 = vunpack.c.l.b16 %v1990
          %v2030 = vunpack.c.l.b16 %v1991
          %v2031 = vunpack.c.l.b16 %v1992
          %v2032 = vunpack.c.l.b16 %v1993
          %v2033 = vunpack.c.l.b16 %v1994
          %v2034 = vunpack.c.l.b16 %v1995
          %v2035 = vunpack.c.l.b16 %v1996
          %v2036 = vunpack.c.l.b16 %v1997
          %v2037 = vunpack.c.l.b16 %v1998
          %v2038 = vunpack.c.l.b16 %v1999
          %v2039 = vunpack.c.l.b16 %v2000
          %v2040 = vunpack.c.l.b16 %v2001
          %v2041 = vunpack.c.l.b16 %v2002
          %v2042 = vunpack.c.l.b16 %v2003
          %v2043 = vunpack.c.l.b16 %v2004
          %v2044 = vunpack.c.l.b16 %v2005
          %v2045 = vpack.c.b16 %v2030, %v2029
          %v2046 = vpack.c.b16 %v2032, %v2031
          %v2047 = vpack.c.b16 %v2034, %v2033
          %v2048 = vpack.c.b16 %v2036, %v2035
          %v2049 = vpack.c.b16 %v2038, %v2037
          %v2050 = vpack.c.b16 %v2040, %v2039
          %v2051 = vpack.c.b16 %v2042, %v2041
          %v2052 = vpack.c.b16 %v2044, %v2043
          %2061 = vmatprep.subr.bf16.mxu0 0
          %2062 = vmatpush1.bf16.msra.mxu0 %v2045
          %2063 = vmatprep.subr.bf16.mxu0 0
          %2064 = vmatpush1.bf16.msra.mxu0 %v2046
          %2065 = vmatprep.subr.bf16.mxu0 0
          %2066 = vmatpush1.bf16.msra.mxu0 %v2047
          %2067 = vmatprep.subr.bf16.mxu0 0
          %2068 = vmatpush1.bf16.msra.mxu0 %v2048
          %2069 = vmatprep.subr.bf16.mxu0 0
          %2070 = vmatpush1.bf16.msra.mxu0 %v2049
          %2071 = vmatprep.subr.bf16.mxu0 0
          %2072 = vmatpush1.bf16.msra.mxu0 %v2050
          %2073 = vmatprep.subr.bf16.mxu0 0
          %2074 = vmatpush1.bf16.msra.mxu0 %v2051
          %2075 = vmatprep.subr.bf16.mxu0 0
          %2076 = vmatpush1.bf16.msra.mxu0 %v2052
          %2077 = vmatprep.subr.bf16.mxu0 0
          %2078 = vmatpush1.bf16.msra.mxu0 0
          %2079 = vmatprep.subr.bf16.mxu0 0
          %2080 = vmatpush1.bf16.msra.mxu0 0
          %2081 = vmatprep.subr.bf16.mxu0 0
          %2082 = vmatpush1.bf16.msra.mxu0 0
          %2083 = vmatprep.subr.bf16.mxu0 0
          %2084 = vmatpush1.bf16.msra.mxu0 0
          %2085 = vmatprep.subr.bf16.mxu0 0
          %2086 = vmatpush1.bf16.msra.mxu0 0
          %2087 = vmatprep.subr.bf16.mxu0 0
          %2088 = vmatpush1.bf16.msra.mxu0 0
          %2089 = vmatprep.subr.bf16.mxu0 0
          %2090 = vmatpush1.bf16.msra.mxu0 0
          %2091 = vmatprep.subr.bf16.mxu0 0
          %2092 = vmatpush1.bf16.msra.mxu0 0
          %2093 = vmatprep.mubr.bf16.mxu0 0
          %2094 = vmatmul.mubr.bf16.gmra.mrb[0].mxu0 %v1988
          %v2095 = vpop.f32.mrb[0].mxu0
          %v2096 = vadd.f32 %v2011, %v2095
          %v2097 = vpop.f32.mrb[0].mxu0
          %v2098 = vpop.f32.mrb[0].mxu0
          %v2099 = vadd.f32 %v2011, %v2098
          %v2100 = vpop.f32.mrb[0].mxu0
          %2101 = vmatprep.mubr.bf16.mxu0 0
          %2102 = vmatmul.mubr.bf16.gmra.mrb[0].mxu0 %v1989
          %v2103 = vpop.f32.mrb[0].mxu0
          %v2104 = vadd.f32 %v2011, %v2103
          %v2105 = vpop.f32.mrb[0].mxu0
          %v2106 = vpop.f32.mrb[0].mxu0
          %v2107 = vadd.f32 %v2011, %v2106
          %v2108 = vpop.f32.mrb[0].mxu0
          %2109 = vdwg.mxu0
          %v2110 = vmax.f32 %v2096, 0.0
          %v2111 = vmax.f32 %v2099, 0.0
          %v2112 = vmax.f32 %v2104, 0.0
          %v2113 = vmax.f32 %v2107, 0.0
          %v2114 = vpack.c.bf16 %v2111, %v2110
          %v2115 = vpack.c.bf16 %v2113, %v2112
          %2116 = vst [vmem:[#allocation2] sm:$0xff] %v2114
          %2117 = vst [vmem:[#allocation2 + $0x8] sm:$0xff] %v2115
        $region112: #{tpu_custom_call.1} parent=87 // pred_fallthru
          _
        %v2118 = vld [vmem:[#allocation2] sm:$0xff]
        %v2119 = vld [vmem:[#allocation2 + $0x8] sm:$0xff]
        %v2120 = vld [vmem:[#allocation11] sm:$0xff]
        %v2121 = vld [vmem:[#allocation11 + $0x8] sm:$0xff]
        %v2122 = vld [vmem:[#allocation11 + $0x10] sm:$0xff]
        %v2123 = vld [vmem:[#allocation11 + $0x18] sm:$0xff]
        %v2124 = vld [vmem:[#allocation11 + $0x20] sm:$0xff]
        %v2125 = vld [vmem:[#allocation11 + $0x28] sm:$0xff]
        %v2126 = vld [vmem:[#allocation11 + $0x30] sm:$0xff]
        %v2127 = vld [vmem:[#allocation11 + $0x38] sm:$0xff]
        %v2128 = vld [vmem:[#allocation11 + $0x40] sm:$0xff]
        %v2129 = vld [vmem:[#allocation11 + $0x48] sm:$0xff]
        %v2130 = vld [vmem:[#allocation11 + $0x50] sm:$0xff]
        %v2131 = vld [vmem:[#allocation11 + $0x58] sm:$0xff]
        %v2132 = vld [vmem:[#allocation11 + $0x60] sm:$0xff]
        %v2133 = vld [vmem:[#allocation11 + $0x68] sm:$0xff]
        %v2134 = vld [vmem:[#allocation11 + $0x70] sm:$0xff]
        %v2135 = vld [vmem:[#allocation11 + $0x78] sm:$0xff]
        %v2136 = vld [vmem:[#allocation11 + $0x80] sm:$0xff]
        %v2137 = vld [vmem:[#allocation11 + $0x88] sm:$0xff]
        %v2138 = vld [vmem:[#allocation11 + $0x90] sm:$0xff]
        %v2139 = vld [vmem:[#allocation11 + $0x98] sm:$0xff]
        %v2140 = vld [vmem:[#allocation11 + $0xa0] sm:$0xff]
        %v2141 = vld [vmem:[#allocation11 + $0xa8] sm:$0xff]
        %v2142 = vld [vmem:[#allocation11 + $0xb0] sm:$0xff]
        %v2143 = vld [vmem:[#allocation11 + $0xb8] sm:$0xff]
        %v2144 = vld [vmem:[#allocation11 + $0xc0] sm:$0xff]
        %v2145 = vld [vmem:[#allocation11 + $0xc8] sm:$0xff]
        %v2146 = vld [vmem:[#allocation11 + $0xd0] sm:$0xff]
        %v2147 = vld [vmem:[#allocation11 + $0xd8] sm:$0xff]
        %v2148 = vld [vmem:[#allocation11 + $0xe0] sm:$0xff]
        %v2149 = vld [vmem:[#allocation11 + $0xe8] sm:$0xff]
        %v2150 = vld [vmem:[#allocation11 + $0xf0] sm:$0xff]
        %v2151 = vld [vmem:[#allocation11 + $0xf8] sm:$0xff]
        %v2152 = vld [vmem:[%s689] sm:$0xf]
        %v2154 = vlaneseq
        %v2155 = vshrl.u32 %v2154, 7
        %v2156 = vsub.s32 0, %v2155
        %v2157 = vrot.slane %v2152, %v2156
        %v2158 = vlaneseq
        %v2159 = vshrl.u32 %v2158, 7
        %v2160 = vsub.s32 1, %v2159
        %v2161 = vrot.slane %v2152, %v2160
        %v2162 = vlaneseq
        %v2163 = vshrl.u32 %v2162, 7
        %v2164 = vsub.s32 2, %v2163
        %v2165 = vrot.slane %v2152, %v2164
        %v2166 = vlaneseq
        %v2167 = vshrl.u32 %v2166, 7
        %v2168 = vsub.s32 3, %v2167
        %v2169 = vrot.slane %v2152, %v2168
        %v2206 = vunpack.c.l.b16 %v2120
        %v2207 = vunpack.c.h.b16 %v2120
        %v2208 = vunpack.c.l.b16 %v2121
        %v2209 = vunpack.c.h.b16 %v2121
        %v2210 = vunpack.c.l.b16 %v2122
        %v2211 = vunpack.c.h.b16 %v2122
        %v2212 = vunpack.c.l.b16 %v2123
        %v2213 = vunpack.c.h.b16 %v2123
        %v2214 = vunpack.c.l.b16 %v2124
        %v2215 = vunpack.c.h.b16 %v2124
        %v2216 = vunpack.c.l.b16 %v2125
        %v2217 = vunpack.c.h.b16 %v2125
        %v2218 = vunpack.c.l.b16 %v2126
        %v2219 = vunpack.c.h.b16 %v2126
        %v2220 = vunpack.c.l.b16 %v2127
        %v2221 = vunpack.c.h.b16 %v2127
        %v2222 = vunpack.c.l.b16 %v2128
        %v2223 = vunpack.c.h.b16 %v2128
        %v2224 = vunpack.c.l.b16 %v2129
        %v2225 = vunpack.c.h.b16 %v2129
        %v2226 = vunpack.c.l.b16 %v2130
        %v2227 = vunpack.c.h.b16 %v2130
        %v2228 = vunpack.c.l.b16 %v2131
        %v2229 = vunpack.c.h.b16 %v2131
        %v2230 = vunpack.c.l.b16 %v2132
        %v2231 = vunpack.c.h.b16 %v2132
        %v2232 = vunpack.c.l.b16 %v2133
        %v2233 = vunpack.c.h.b16 %v2133
        %v2234 = vunpack.c.l.b16 %v2134
        %v2235 = vunpack.c.h.b16 %v2134
        %v2236 = vunpack.c.l.b16 %v2135
        %v2237 = vunpack.c.h.b16 %v2135
        %v2238 = vunpack.c.l.b16 %v2136
        %v2239 = vunpack.c.h.b16 %v2136
        %v2240 = vunpack.c.l.b16 %v2137
        %v2241 = vunpack.c.h.b16 %v2137
        %v2242 = vunpack.c.l.b16 %v2138
        %v2243 = vunpack.c.h.b16 %v2138
        %v2244 = vunpack.c.l.b16 %v2139
        %v2245 = vunpack.c.h.b16 %v2139
        %v2246 = vunpack.c.l.b16 %v2140
        %v2247 = vunpack.c.h.b16 %v2140
        %v2248 = vunpack.c.l.b16 %v2141
        %v2249 = vunpack.c.h.b16 %v2141
        %v2250 = vunpack.c.l.b16 %v2142
        %v2251 = vunpack.c.h.b16 %v2142
        %v2252 = vunpack.c.l.b16 %v2143
        %v2253 = vunpack.c.h.b16 %v2143
        %v2254 = vunpack.c.l.b16 %v2144
        %v2255 = vunpack.c.h.b16 %v2144
        %v2256 = vunpack.c.l.b16 %v2145
        %v2257 = vunpack.c.h.b16 %v2145
        %v2258 = vunpack.c.l.b16 %v2146
        %v2259 = vunpack.c.h.b16 %v2146
        %v2260 = vunpack.c.l.b16 %v2147
        %v2261 = vunpack.c.h.b16 %v2147
        %v2262 = vunpack.c.l.b16 %v2148
        %v2263 = vunpack.c.h.b16 %v2148
        %v2264 = vunpack.c.l.b16 %v2149
        %v2265 = vunpack.c.h.b16 %v2149
        %v2266 = vunpack.c.l.b16 %v2150
        %v2267 = vunpack.c.h.b16 %v2150
        %v2268 = vunpack.c.l.b16 %v2151
        %v2269 = vunpack.c.h.b16 %v2151
        %v2270 = vpack.c.b16 %v2210, %v2206
        %v2271 = vpack.c.b16 %v2211, %v2207
        %v2272 = vpack.c.b16 %v2212, %v2208
        %v2273 = vpack.c.b16 %v2213, %v2209
        %v2274 = vpack.c.b16 %v2218, %v2214
        %v2275 = vpack.c.b16 %v2219, %v2215
        %v2276 = vpack.c.b16 %v2220, %v2216
        %v2277 = vpack.c.b16 %v2221, %v2217
        %v2278 = vpack.c.b16 %v2226, %v2222
        %v2279 = vpack.c.b16 %v2227, %v2223
        %v2280 = vpack.c.b16 %v2228, %v2224
        %v2281 = vpack.c.b16 %v2229, %v2225
        %v2282 = vpack.c.b16 %v2234, %v2230
        %v2283 = vpack.c.b16 %v2235, %v2231
        %v2284 = vpack.c.b16 %v2236, %v2232
        %v2285 = vpack.c.b16 %v2237, %v2233
        %v2286 = vpack.c.b16 %v2242, %v2238
        %v2287 = vpack.c.b16 %v2243, %v2239
        %v2288 = vpack.c.b16 %v2244, %v2240
        %v2289 = vpack.c.b16 %v2245, %v2241
        %v2290 = vpack.c.b16 %v2250, %v2246
        %v2291 = vpack.c.b16 %v2251, %v2247
        %v2292 = vpack.c.b16 %v2252, %v2248
        %v2293 = vpack.c.b16 %v2253, %v2249
        %v2294 = vpack.c.b16 %v2258, %v2254
        %v2295 = vpack.c.b16 %v2259, %v2255
        %v2296 = vpack.c.b16 %v2260, %v2256
        %v2297 = vpack.c.b16 %v2261, %v2257
        %v2298 = vpack.c.b16 %v2266, %v2262
        %v2299 = vpack.c.b16 %v2267, %v2263
        %v2300 = vpack.c.b16 %v2268, %v2264
        %v2301 = vpack.c.b16 %v2269, %v2265
        %2334 = vmatprep.subr.bf16.mxu0 %v2271
        %2335 = vmatpush1.bf16.msra.mxu0 %v2270
        %2336 = vmatprep.subr.bf16.mxu0 %v2275
        %2337 = vmatpush1.bf16.msra.mxu0 %v2274
        %2338 = vmatprep.subr.bf16.mxu0 %v2279
        %2339 = vmatpush1.bf16.msra.mxu0 %v2278
        %2340 = vmatprep.subr.bf16.mxu0 %v2283
        %2341 = vmatpush1.bf16.msra.mxu0 %v2282
        %2342 = vmatprep.subr.bf16.mxu0 %v2287
        %2343 = vmatpush1.bf16.msra.mxu0 %v2286
        %2344 = vmatprep.subr.bf16.mxu0 %v2291
        %2345 = vmatpush1.bf16.msra.mxu0 %v2290
        %2346 = vmatprep.subr.bf16.mxu0 %v2295
        %2347 = vmatpush1.bf16.msra.mxu0 %v2294
        %2348 = vmatprep.subr.bf16.mxu0 %v2299
        %2349 = vmatpush1.bf16.msra.mxu0 %v2298
        %2350 = vmatprep.subr.bf16.mxu0 0
        %2351 = vmatpush1.bf16.msra.mxu0 0
        %2352 = vmatprep.subr.bf16.mxu0 0
        %2353 = vmatpush1.bf16.msra.mxu0 0
        %2354 = vmatprep.subr.bf16.mxu0 0
        %2355 = vmatpush1.bf16.msra.mxu0 0
        %2356 = vmatprep.subr.bf16.mxu0 0
        %2357 = vmatpush1.bf16.msra.mxu0 0
        %2358 = vmatprep.subr.bf16.mxu0 0
        %2359 = vmatpush1.bf16.msra.mxu0 0
        %2360 = vmatprep.subr.bf16.mxu0 0
        %2361 = vmatpush1.bf16.msra.mxu0 0
        %2362 = vmatprep.subr.bf16.mxu0 0
        %2363 = vmatpush1.bf16.msra.mxu0 0
        %2364 = vmatprep.subr.bf16.mxu0 0
        %2365 = vmatpush1.bf16.msra.mxu0 0
        %2366 = vmatprep.mubr.bf16.mxu0 0
        %2367 = vmatmul.mubr.bf16.gmra.mrb[0].mxu0 %v2118
        %v2368 = vpop.f32.mrb[0].mxu0
        %v2369 = vadd.f32 %v2157, %v2368
        %v2370 = vpop.f32.mrb[0].mxu0
        %v2371 = vadd.f32 %v2161, %v2370
        %v2372 = vpop.f32.mrb[0].mxu0
        %v2373 = vadd.f32 %v2157, %v2372
        %v2374 = vpop.f32.mrb[0].mxu0
        %v2375 = vadd.f32 %v2161, %v2374
        %2376 = vmatprep.mubr.bf16.mxu0 0
        %2377 = vmatmul.mubr.bf16.gmra.mrb[0].mxu0 %v2119
        %v2378 = vpop.f32.mrb[0].mxu0
        %v2379 = vadd.f32 %v2157, %v2378
        %v2380 = vpop.f32.mrb[0].mxu0
        %v2381 = vadd.f32 %v2161, %v2380
        %v2382 = vpop.f32.mrb[0].mxu0
        %v2383 = vadd.f32 %v2157, %v2382
        %v2384 = vpop.f32.mrb[0].mxu0
        %v2385 = vadd.f32 %v2161, %v2384
        %2386 = vdwg.mxu0
        %2387 = vmatprep.subr.bf16.mxu0 %v2273
        %2388 = vmatpush1.bf16.msra.mxu0 %v2272
        %2389 = vmatprep.subr.bf16.mxu0 %v2277
        %2390 = vmatpush1.bf16.msra.mxu0 %v2276
        %2391 = vmatprep.subr.bf16.mxu0 %v2281
        %2392 = vmatpush1.bf16.msra.mxu0 %v2280
        %2393 = vmatprep.subr.bf16.mxu0 %v2285
        %2394 = vmatpush1.bf16.msra.mxu0 %v2284
        %2395 = vmatprep.subr.bf16.mxu0 %v2289
        %2396 = vmatpush1.bf16.msra.mxu0 %v2288
        %2397 = vmatprep.subr.bf16.mxu0 %v2293
        %2398 = vmatpush1.bf16.msra.mxu0 %v2292
        %2399 = vmatprep.subr.bf16.mxu0 %v2297
        %2400 = vmatpush1.bf16.msra.mxu0 %v2296
        %2401 = vmatprep.subr.bf16.mxu0 %v2301
        %2402 = vmatpush1.bf16.msra.mxu0 %v2300
        %2403 = vmatprep.subr.bf16.mxu0 0
        %2404 = vmatpush1.bf16.msra.mxu0 0
        %2405 = vmatprep.subr.bf16.mxu0 0
        %2406 = vmatpush1.bf16.msra.mxu0 0
        %2407 = vmatprep.subr.bf16.mxu0 0
        %2408 = vmatpush1.bf16.msra.mxu0 0
        %2409 = vmatprep.subr.bf16.mxu0 0
        %2410 = vmatpush1.bf16.msra.mxu0 0
        %2411 = vmatprep.subr.bf16.mxu0 0
        %2412 = vmatpush1.bf16.msra.mxu0 0
        %2413 = vmatprep.subr.bf16.mxu0 0
        %2414 = vmatpush1.bf16.msra.mxu0 0
        %2415 = vmatprep.subr.bf16.mxu0 0
        %2416 = vmatpush1.bf16.msra.mxu0 0
        %2417 = vmatprep.subr.bf16.mxu0 0
        %2418 = vmatpush1.bf16.msra.mxu0 0
        %2419 = vmatprep.mubr.bf16.mxu0 0
        %2420 = vmatmul.mubr.bf16.gmra.mrb[0].mxu0 %v2118
        %v2421 = vpop.f32.mrb[0].mxu0
        %v2422 = vadd.f32 %v2165, %v2421
        %v2423 = vpop.f32.mrb[0].mxu0
        %v2424 = vadd.f32 %v2169, %v2423
        %v2425 = vpop.f32.mrb[0].mxu0
        %v2426 = vadd.f32 %v2165, %v2425
        %v2427 = vpop.f32.mrb[0].mxu0
        %v2428 = vadd.f32 %v2169, %v2427
        %2429 = vmatprep.mubr.bf16.mxu0 0
        %2430 = vmatmul.mubr.bf16.gmra.mrb[0].mxu0 %v2119
        %v2431 = vpop.f32.mrb[0].mxu0
        %v2432 = vadd.f32 %v2165, %v2431
        %v2433 = vpop.f32.mrb[0].mxu0
        %v2434 = vadd.f32 %v2169, %v2433
        %v2435 = vpop.f32.mrb[0].mxu0
        %v2436 = vadd.f32 %v2165, %v2435
        %v2437 = vpop.f32.mrb[0].mxu0
        %v2438 = vadd.f32 %v2169, %v2437
        %2439 = vdwg.mxu0
        %v2440 = vmul.f32 %v2369, 0.5
        %v2441 = vmul.f32 %v2371, 0.5
        %v2442 = vmul.f32 %v2422, 0.5
        %v2443 = vmul.f32 %v2424, 0.5
        %v2444 = vmul.f32 %v2373, 0.5
        %v2445 = vmul.f32 %v2375, 0.5
        %v2446 = vmul.f32 %v2426, 0.5
        %v2447 = vmul.f32 %v2428, 0.5
        %v2448 = vmul.f32 %v2379, 0.5
        %v2449 = vmul.f32 %v2381, 0.5
        %v2450 = vmul.f32 %v2432, 0.5
        %v2451 = vmul.f32 %v2434, 0.5
        %v2452 = vmul.f32 %v2383, 0.5
        %v2453 = vmul.f32 %v2385, 0.5
        %v2454 = vmul.f32 %v2436, 0.5
        %v2455 = vmul.f32 %v2438, 0.5
        %v2456 = vtanh.pop %v2440
        %v2457 = vtanh.pop %v2441
        %v2458 = vtanh.pop %v2442
        %v2459 = vtanh.pop %v2443
        %v2460 = vtanh.pop %v2444
        %v2461 = vtanh.pop %v2445
        %v2462 = vtanh.pop %v2446
        %v2463 = vtanh.pop %v2447
        %v2464 = vtanh.pop %v2448
        %v2465 = vtanh.pop %v2449
        %v2466 = vtanh.pop %v2450
        %v2467 = vtanh.pop %v2451
        %v2468 = vtanh.pop %v2452
        %v2469 = vtanh.pop %v2453
        %v2470 = vtanh.pop %v2454
        %v2471 = vtanh.pop %v2455
        %v2472 = vadd.f32 %v2456, 1.0
        %v2473 = vadd.f32 %v2457, 1.0
        %v2474 = vadd.f32 %v2458, 1.0
        %v2475 = vadd.f32 %v2459, 1.0
        %v2476 = vadd.f32 %v2460, 1.0
        %v2477 = vadd.f32 %v2461, 1.0
        %v2478 = vadd.f32 %v2462, 1.0
        %v2479 = vadd.f32 %v2463, 1.0
        %v2480 = vadd.f32 %v2464, 1.0
        %v2481 = vadd.f32 %v2465, 1.0
        %v2482 = vadd.f32 %v2466, 1.0
        %v2483 = vadd.f32 %v2467, 1.0
        %v2484 = vadd.f32 %v2468, 1.0
        %v2485 = vadd.f32 %v2469, 1.0
        %v2486 = vadd.f32 %v2470, 1.0
        %v2487 = vadd.f32 %v2471, 1.0
        %v2488 = vmul.f32 %v2472, 0.5
        %v2489 = vmul.f32 %v2473, 0.5
        %v2490 = vmul.f32 %v2474, 0.5
        %v2491 = vmul.f32 %v2475, 0.5
        %v2492 = vmul.f32 %v2476, 0.5
        %v2493 = vmul.f32 %v2477, 0.5
        %v2494 = vmul.f32 %v2478, 0.5
        %v2495 = vmul.f32 %v2479, 0.5
        %v2496 = vmul.f32 %v2480, 0.5
        %v2497 = vmul.f32 %v2481, 0.5
        %v2498 = vmul.f32 %v2482, 0.5
        %v2499 = vmul.f32 %v2483, 0.5
        %v2500 = vmul.f32 %v2484, 0.5
        %v2501 = vmul.f32 %v2485, 0.5
        %v2502 = vmul.f32 %v2486, 0.5
        %v2503 = vmul.f32 %v2487, 0.5
        %v2504 = vpack.c.bf16 %v2492, %v2488
        %v2505 = vpack.c.bf16 %v2493, %v2489
        %v2506 = vpack.c.bf16 %v2494, %v2490
        %v2507 = vpack.c.bf16 %v2495, %v2491
        %v2508 = vpack.c.bf16 %v2500, %v2496
        %v2509 = vpack.c.bf16 %v2501, %v2497
        %v2510 = vpack.c.bf16 %v2502, %v2498
        %v2511 = vpack.c.bf16 %v2503, %v2499
        %v2520 = vunpack.c.l.b16 %v2504
        %v2521 = vunpack.c.l.b16 %v2505
        %v2522 = vunpack.c.l.b16 %v2506
        %v2523 = vunpack.c.l.b16 %v2507
        %v2524 = vunpack.c.h.b16 %v2504
        %v2525 = vunpack.c.h.b16 %v2505
        %v2526 = vunpack.c.h.b16 %v2506
        %v2527 = vunpack.c.h.b16 %v2507
        %v2528 = vunpack.c.l.b16 %v2508
        %v2529 = vunpack.c.l.b16 %v2509
        %v2530 = vunpack.c.l.b16 %v2510
        %v2531 = vunpack.c.l.b16 %v2511
        %v2532 = vunpack.c.h.b16 %v2508
        %v2533 = vunpack.c.h.b16 %v2509
        %v2534 = vunpack.c.h.b16 %v2510
        %v2535 = vunpack.c.h.b16 %v2511
        %v2536 = vpack.c.b16 %v2521, %v2520
        %v2537 = vpack.c.b16 %v2523, %v2522
        %v2538 = vpack.c.b16 %v2525, %v2524
        %v2539 = vpack.c.b16 %v2527, %v2526
        %v2540 = vpack.c.b16 %v2529, %v2528
        %v2541 = vpack.c.b16 %v2531, %v2530
        %v2542 = vpack.c.b16 %v2533, %v2532
        %v2543 = vpack.c.b16 %v2535, %v2534
        %2552 = vst [vmem:[%s677] sm:$0xff] %v2536
        %2553 = vst [vmem:[%s677 + $0x8] sm:$0xff] %v2537
        %2554 = vst [vmem:[%s677 + $0x10] sm:$0xff] %v2538
        %2555 = vst [vmem:[%s677 + $0x18] sm:$0xff] %v2539
        %2556 = vst [vmem:[%s677 + $0x20] sm:$0xff] %v2540
        %2557 = vst [vmem:[%s677 + $0x28] sm:$0xff] %v2541
        %2558 = vst [vmem:[%s677 + $0x30] sm:$0xff] %v2542
        %2559 = vst [vmem:[%s677 + $0x38] sm:$0xff] %v2543
        %s2560 = sand.u32 %s435, 1
        %s2561 = scalar_lea.sflag [#allocation5], %s2560
        %s2562 = sand.u32 %s435, 1
        %s2563 = smul.addr %s2562, 64
        %s2564 = scalar_lea.vmem [#allocation12], %s2563
        // Predicated region
        $region113: #{tpu_custom_call.1} parent=87 // pred_check
          %p2565 = pneg %p445
        $region114: #{tpu_custom_call.1} parent=87 // pred_check_branch
          %2567 = sbr.rel (%p2565) target = $region116
        $region115: #{tpu_custom_call.1} parent=87 // pred_region
          %s2568 = smul.u32 4, %s40
          %s2569 = smul.u32 4, %s41
          %s2571 = ssub.s32 1024, 1024
          %2572 = vsyncadd %s2561, %s2571
          %s2573 = smul.addr %s2568, 4
          %s2574 = sadd.s32 %s2569, %s2573
          %s2575 = smul.addr %s2574, 64
          %s2576 = scalar_lea.hbm %s17, %s2575
          %s2577 = sshll.u32 %s2564, 4
          %s2578 = int_to_ptr.vmem [resolvable:$true] %s2577
          %2583 = dma.vmem_to_hbm [thread:$0]  %s2578, 1024, %s2576, %s2561, 256, 256, 16
        $region116: #{tpu_custom_call.1} parent=87 // pred_fallthru
          _
      $region88: #{tpu_custom_call.1} parent=5 // pred_fallthru
        _
      %p2584 = scmp.le.s32.totalorder 2, %s31
      // Predicated region
      $region117: #{tpu_custom_call.1} parent=5 // pred_check
        %p2585 = pneg %p2584
      $region118: #{tpu_custom_call.1} parent=5 // pred_check_branch
        %2587 = sbr.rel (%p2585) target = $region120
      $region119: #{tpu_custom_call.1} parent=5 // pred_region
        %s2588 = ssub.s32 %s31, 2
        // Predicated region
        $region121: #{tpu_custom_call.1} parent=119 // pred_check
          %p2589 = pneg %p451
        $region122: #{tpu_custom_call.1} parent=119 // pred_check_branch
          %2591 = sbr.rel (%p2589) target = $region124
        $region123: #{tpu_custom_call.1} parent=119 // pred_region
          %s2592 = sand.u32 %s436, 1
          %s2593 = scalar_lea.sflag [#allocation5], %s2592
          %s2594 = sand.u32 %s436, 1
          %s2595 = smul.addr %s2594, 64
          %s2596 = scalar_lea.vmem [#allocation12], %s2595
          %2597 = dma.done %s2593, 1024
        $region124: #{tpu_custom_call.1} parent=119 // pred_fallthru
          _
      $region120: #{tpu_custom_call.1} parent=5 // pred_fallthru
        _
    $region6: #{tpu_custom_call.1} parent=1 // loop_footer
      %s35 = sadd.s32 1, %s31
    $region7: #{tpu_custom_call.1} parent=1 // loop_footer_branch
      %30 = sbr.rel target = $region3
    $region8: #{tpu_custom_call.1} parent=1 // loop_exit
      _
    %2598 = vsyncpa [#allocation4], 1
    %s2599 = scalar_lea.sflag [#allocation4], 1
    %2600 = vsyncpa %s2599, 1
    %2601 = vsyncpa [#allocation7], 1
    %2602 = vsyncpa [#allocation10], 1
    %2603 = vsyncpa [#allocation5], 1
    %s2604 = scalar_lea.sflag [#allocation5], 1
    %2605 = vsyncpa %s2604, 1

</llo_original>
